<compile_context>
chip_gen: v7x
topology: tpu7x:2x2x1
jax: 0.10.0
libtpu: 0.0.40
codegen_flags: <defaults>
</compile_context>

<pallas_src>
import functools

import jax
import jax.numpy as jnp
from jax.experimental import pallas as pl
from jax.experimental.pallas import tpu as pltpu


def _round_up(x, m):
    return ((x + m - 1) // m) * m


# ----------------------------- Pallas kernels ------------------------------

def conv_bn_relu_kernel(p_ref, w_ref, b_ref, o_ref):
    """One M-tile of the im2col matmul (BN scale pre-folded into weights)."""
    acc = jnp.dot(p_ref[...], w_ref[...], preferred_element_type=jnp.float32)
    o_ref[...] = jnp.maximum(acc + b_ref[...], 0.0)


def maxpool_3x3_s2_kernel(x_ref, o_ref):
    """MaxPool kernel=[1,3,3], stride=[1,2,2], pad=[0,1,1] for one (n,t) frame.

    x_ref: (1, He, Wq, 2*C)  He = 2*(Hp+1) zero-padded rows; Wq = Wp+1 column
           pairs with column parity folded into lanes ([0:C] even, [C:2C] odd).
    o_ref: (1, Hp, Wp, C)
    """
    _, Hp, Wp, C = o_ref.shape
    He, Wq = x_ref.shape[1], x_ref.shape[2]
    x = x_ref[0].reshape(He // 2, 2, Wq, 2 * C)      # [a, p, b, :] = row 2a+p
    xe = x[:, 0]                                     # rows 2a
    xo = x[:, 1]                                     # rows 2a+1
    # rows {2hp, 2hp+1, 2hp+2}
    h = jnp.maximum(jnp.maximum(xe[:Hp], xo[:Hp]), xe[1:Hp + 1])   # (Hp, Wq, 2C)
    he = h[:, :, :C]                                 # cols 2wp
    ho = h[:, :, C:]                                 # cols 2wp+1
    # cols {2wp, 2wp+1, 2wp+2}
    o_ref[0] = jnp.maximum(jnp.maximum(he[:, :Wp], ho[:, :Wp]), he[:, 1:Wp + 1])


# ------------------------------ Host wrapper -------------------------------

def video_model_stem_forward(x, weight, gamma, beta, running_mean, running_var,
                             kernel, stride, padding, eps=1e-5):
    """x: (N, Cin, T, H, W) float32 (PyTorch NCDHW).  Returns (N, Cout, To, Hp, Wp)."""
    kt, kh, kw = kernel
    st, sh, sw = stride
    pt, ph, pw = padding
    N, Cin, T, H, W = x.shape
    Cout = weight.shape[0]

    To = (T + 2 * pt - kt) // st + 1
    Ho = (H + 2 * ph - kh) // sh + 1
    Wo = (W + 2 * pw - kw) // sw + 1

    # ---- glue: im2col (channels-last) ----
    xl = jnp.transpose(x, (0, 2, 3, 4, 1))                       # (N,T,H,W,Cin)
    xp = jnp.pad(xl, ((0, 0), (pt, pt), (ph, ph), (pw, pw), (0, 0)))
    patches = []
    for dt in range(kt):
        for dh in range(kh):
            for dw in range(kw):
                patches.append(
                    xp[:,
                       dt:dt + (To - 1) * st + 1:st,
                       dh:dh + (Ho - 1) * sh + 1:sh,
                       dw:dw + (Wo - 1) * sw + 1:sw,
                       :])
    patches = jnp.stack(patches, axis=-2)                        # (N,To,Ho,Wo,kk,Cin)
    K = kt * kh * kw * Cin
    M = N * To * Ho * Wo
    patches = patches.reshape(M, K)

    # Pad K to a lane multiple and Cout to 128 (lane-dense stores / full MXU N).
    KP = _round_up(K, 128)
    CP = _round_up(Cout, 128)
    tm = min(512, _round_up(M, 8))
    MP = _round_up(M, tm)

    patches = jnp.pad(patches, ((0, MP - M), (0, KP - K))).astype(jnp.bfloat16)

    # weight: (Cout, Cin, kt, kh, kw) -> (K, Cout); fold eval-mode BN scale in.
    scale = gamma / jnp.sqrt(running_var + eps)
    bias = beta - running_mean * scale
    w2 = jnp.transpose(weight, (2, 3, 4, 1, 0)).reshape(K, Cout)
    w2 = (w2 * scale[None, :]).astype(jnp.float32)
    w2 = jnp.pad(w2, ((0, KP - K), (0, CP - Cout))).astype(jnp.bfloat16)
    bias2 = jnp.pad(bias.astype(jnp.float32), (0, CP - Cout)).reshape(1, CP)

    flops = 2 * MP * KP * CP
    bytes_accessed = MP * KP * 2 + KP * CP * 2 + CP * 4 + MP * CP * 4

    # ---- Pallas kernel 1: conv (matmul) + folded-BN bias + ReLU ----
    conv_out = pl.pallas_call(
        conv_bn_relu_kernel,
        out_shape=jax.ShapeDtypeStruct((MP, CP), jnp.float32),
        grid=(MP // tm,),
        in_specs=[
            pl.BlockSpec((tm, KP), lambda i: (i, 0)),
            pl.BlockSpec((KP, CP), lambda i: (0, 0)),
            pl.BlockSpec((1, CP), lambda i: (0, 0)),
        ],
        out_specs=pl.BlockSpec((tm, CP), lambda i: (i, 0)),
        compiler_params=pltpu.CompilerParams(dimension_semantics=("parallel",)),
        cost_estimate=pl.CostEstimate(flops=flops, transcendentals=0,
                                      bytes_accessed=bytes_accessed),
    )(patches, w2, bias2)

    conv_out = conv_out[:M].reshape(N * To, Ho, Wo, CP)

    # ---- maxpool glue: one zero-pad + pure reshapes (no 9x duplication) ----
    Hp = (Ho + 2 - 3) // 2 + 1
    Wp = (Wo + 2 - 3) // 2 + 1
    He = 2 * (Hp + 1)
    We = 2 * (Wp + 1)
    pool_in = jnp.pad(conv_out,
                      ((0, 0), (1, He - Ho - 1), (1, We - Wo - 1), (0, 0)))
    pool_in = pool_in.reshape(N * To, He, We // 2, 2 * CP)

    # ---- Pallas kernel 2: tiled 3x3/stride-2 max pool ----
    NT = N * To
    pooled = pl.pallas_call(
        maxpool_3x3_s2_kernel,
        out_shape=jax.ShapeDtypeStruct((NT, Hp, Wp, CP), jnp.float32),
        grid=(NT,),
        in_specs=[pl.BlockSpec((1, He, We // 2, 2 * CP),
                               lambda i: (i, 0, 0, 0))],
        out_specs=pl.BlockSpec((1, Hp, Wp, CP), lambda i: (i, 0, 0, 0)),
        compiler_params=pltpu.CompilerParams(dimension_semantics=("parallel",)),
    )(pool_in)

    pooled = pooled[:, :, :, :Cout].reshape(N, To, Hp, Wp, Cout)
    return jnp.transpose(pooled, (0, 4, 1, 2, 3))                # NCDHW


# --------------------------- pure-JAX reference ----------------------------

def reference_forward(x, weight, gamma, beta, running_mean, running_var,
                      kernel, stride, padding, eps=1e-5):
    y = jax.lax.conv_general_dilated(
        x.astype(jnp.float32), weight.astype(jnp.float32),
        window_strides=tuple(stride),
        padding=[(p, p) for p in padding],
        dimension_numbers=('NCDHW', 'OIDHW', 'NCDHW'),
        precision=jax.lax.Precision.HIGHEST)
    scale = gamma / jnp.sqrt(running_var + eps)
    bias = beta - running_mean * scale
    y = y * scale[None, :, None, None, None] + bias[None, :, None, None, None]
    y = jnp.maximum(y, 0.0)
    y = jax.lax.reduce_window(
        y, -jnp.inf, jax.lax.max,
        window_dimensions=(1, 1, 1, 3, 3),
        window_strides=(1, 1, 1, 2, 2),
        padding=((0, 0), (0, 0), (0, 0), (1, 1), (1, 1)))
    return y


# ------------------------------------ main ---------------------------------

if __name__ == "__main__":
    # Stem config (SlowFast-like): dim_in=3, dim_out=8
    kernel = (3, 7, 7)
    stride = (1, 2, 2)
    padding = (1, 3, 3)
    eps = 1e-5

    N, Cin, T, H, W = 2, 3, 4, 32, 32
    Cout = 8

    key = jax.random.PRNGKey(0)
    k_x, k_w, k_g, k_b, k_m, k_v = jax.random.split(key, 6)

    x = jax.random.normal(k_x, (N, Cin, T, H, W), dtype=jnp.float32)
    weight = 0.1 * jax.random.normal(k_w, (Cout, Cin) + kernel, dtype=jnp.float32)
    gamma = 0.5 + jax.random.uniform(k_g, (Cout,), dtype=jnp.float32)
    beta = 0.1 * jax.random.normal(k_b, (Cout,), dtype=jnp.float32)
    running_mean = 0.1 * jax.random.normal(k_m, (Cout,), dtype=jnp.float32)
    running_var = 0.5 + jax.random.uniform(k_v, (Cout,), dtype=jnp.float32)

    fwd = jax.jit(functools.partial(
        video_model_stem_forward,
        kernel=kernel, stride=stride, padding=padding, eps=eps))

    out = fwd(x, weight, gamma, beta, running_mean, running_var)
    out = jax.block_until_ready(out)

    ref = reference_forward(x, weight, gamma, beta, running_mean, running_var,
                            kernel, stride, padding, eps)
    ref = jax.block_until_ready(ref)

    assert out.shape == ref.shape, (out.shape, ref.shape)
    # Tolerance accounts for bf16 MXU inputs (f32 accumulation) over K=441.
    max_err = float(jnp.max(jnp.abs(out - ref)))
    assert jnp.allclose(out, ref, rtol=2e-2, atol=5e-2), max_err

    print("KERNEL_OK")
</pallas_src>

<mosaic_0001>
module attributes {stable_mosaic.version = 11 : i64} {
  func.func @conv_bn_relu_kernel(%arg0: i32, %arg1: memref<512x512xbf16, #tpu.memory_space<vmem>>, %arg2: memref<512x128xbf16, #tpu.memory_space<vmem>>, %arg3: memref<1x128xf32, #tpu.memory_space<vmem>>, %arg4: memref<512x128xf32, #tpu.memory_space<vmem>>) attributes {dimension_semantics = [#tpu.dimension_semantics<parallel>], iteration_bounds = array<i64: 4>, scalar_prefetch = 0 : i64, scratch_operands = 0 : i64, tpu.core_type = #tpu.core_type<tc>, window_params = [{transform_indices = @transform_0, window_bounds = array<i64: 512, 512>}, {pipeline_mode = #tpu.pipeline_mode<synchronous>, transform_indices = @transform_1, window_bounds = array<i64: 512, 128>}, {pipeline_mode = #tpu.pipeline_mode<synchronous>, transform_indices = @transform_2, window_bounds = array<i64: 1, 128>}, {transform_indices = @transform_3, window_bounds = array<i64: 512, 128>}]} {
    %c0 = arith.constant 0 : index
    %c0_0 = arith.constant 0 : index
    %0 = vector.load %arg1[%c0, %c0_0] : memref<512x512xbf16, #tpu.memory_space<vmem>>, vector<512x512xbf16>
    %c0_1 = arith.constant 0 : index
    %c0_2 = arith.constant 0 : index
    %1 = vector.load %arg2[%c0_1, %c0_2] : memref<512x128xbf16, #tpu.memory_space<vmem>>, vector<512x128xbf16>
    %cst = arith.constant dense<0.000000e+00> : vector<512x128xf32>
    %2 = tpu.matmul %0, %1, %cst {dimension_numbers = #tpu.dot_dimension_numbers<[1], [0], [0], [1], [0, 0, 1, 1], [], []>} : vector<512x512xbf16>, vector<512x128xbf16>, vector<512x128xf32> -> vector<512x128xf32>
    %c0_3 = arith.constant 0 : index
    %c0_4 = arith.constant 0 : index
    %3 = vector.load %arg3[%c0_3, %c0_4] : memref<1x128xf32, #tpu.memory_space<vmem>>, vector<1x128xf32>
    %4 = vector.broadcast %3 : vector<1x128xf32> to vector<512x128xf32>
    %5 = arith.addf %2, %4 : vector<512x128xf32>
    %cst_5 = arith.constant 0.000000e+00 : f32
    %6 = vector.broadcast %cst_5 : f32 to vector<512x128xf32>
    %7 = arith.maximumf %5, %6 : vector<512x128xf32>
    %c0_6 = arith.constant 0 : index
    %c0_7 = arith.constant 0 : index
    %8 = vector.load %arg4[%c0_6, %c0_7] : memref<512x128xf32, #tpu.memory_space<vmem>>, vector<512x128xf32>
    tpu.vector_store %arg4[%c0_6, %c0_7], %7 {strides = array<i32>} : memref<512x128xf32, #tpu.memory_space<vmem>>, vector<512x128xf32>,
    return
  }
  func.func @transform_0(%arg0: i32) -> (i32, i32) {
    %c0_i32 = arith.constant 0 : i32
    %c0_i32_0 = arith.constant 0 : i32
    return %arg0, %c0_i32 : i32, i32
  }
  func.func @transform_1(%arg0: i32) -> (i32, i32) {
    %c0_i32 = arith.constant 0 : i32
    %c0_i32_0 = arith.constant 0 : i32
    %c0_i32_1 = arith.constant 0 : i32
    return %c0_i32, %c0_i32_0 : i32, i32
  }
  func.func @transform_2(%arg0: i32) -> (i32, i32) {
    %c0_i32 = arith.constant 0 : i32
    %c0_i32_0 = arith.constant 0 : i32
    %c0_i32_1 = arith.constant 0 : i32
    return %c0_i32, %c0_i32_0 : i32, i32
  }
  func.func @transform_3(%arg0: i32) -> (i32, i32) {
    %c0_i32 = arith.constant 0 : i32
    %c0_i32_0 = arith.constant 0 : i32
    return %arg0, %c0_i32 : i32, i32
  }
}

module attributes {stable_mosaic.version = 11 : i64} {
  func.func @maxpool_3x3_s2_kernel(%arg0: i32, %arg1: memref<1x18x9x256xf32, #tpu.memory_space<vmem>>, %arg2: memref<1x8x8x128xf32, #tpu.memory_space<vmem>>) attributes {dimension_semantics = [#tpu.dimension_semantics<parallel>], iteration_bounds = array<i64: 8>, scalar_prefetch = 0 : i64, scratch_operands = 0 : i64, tpu.core_type = #tpu.core_type<tc>, window_params = [{transform_indices = @transform_0, window_bounds = array<i64: 1, 18, 9, 256>}, {transform_indices = @transform_1, window_bounds = array<i64: 1, 8, 8, 128>}]} {
    %c0 = arith.constant 0 : index
    %c0_0 = arith.constant 0 : index
    %c0_1 = arith.constant 0 : index
    %c0_2 = arith.constant 0 : index
    %0 = vector.load %arg1[%c0, %c0_0, %c0_1, %c0_2] : memref<1x18x9x256xf32, #tpu.memory_space<vmem>>, vector<1x18x9x256xf32>
    %1 = vector.shape_cast %0 : vector<1x18x9x256xf32> to vector<18x9x256xf32>
    %2 = vector.shape_cast %1 : vector<18x9x256xf32> to vector<9x2x9x256xf32>
    %3 = vector.extract_strided_slice %2 {offsets = [0, 0, 0, 0], sizes = [9, 1, 9, 256], strides = [1, 1, 1, 1]} : vector<9x2x9x256xf32> to vector<9x1x9x256xf32>
    %4 = vector.shape_cast %3 : vector<9x1x9x256xf32> to vector<9x9x256xf32>
    %5 = vector.extract_strided_slice %2 {offsets = [0, 1, 0, 0], sizes = [9, 1, 9, 256], strides = [1, 1, 1, 1]} : vector<9x2x9x256xf32> to vector<9x1x9x256xf32>
    %6 = vector.shape_cast %5 : vector<9x1x9x256xf32> to vector<9x9x256xf32>
    %7 = vector.extract_strided_slice %4 {offsets = [0, 0, 0], sizes = [8, 9, 256], strides = [1, 1, 1]} : vector<9x9x256xf32> to vector<8x9x256xf32>
    %8 = vector.extract_strided_slice %6 {offsets = [0, 0, 0], sizes = [8, 9, 256], strides = [1, 1, 1]} : vector<9x9x256xf32> to vector<8x9x256xf32>
    %9 = arith.maximumf %7, %8 : vector<8x9x256xf32>
    %10 = vector.extract_strided_slice %4 {offsets = [1, 0, 0], sizes = [8, 9, 256], strides = [1, 1, 1]} : vector<9x9x256xf32> to vector<8x9x256xf32>
    %11 = arith.maximumf %9, %10 : vector<8x9x256xf32>
    %12 = vector.extract_strided_slice %11 {offsets = [0, 0, 0], sizes = [8, 9, 128], strides = [1, 1, 1]} : vector<8x9x256xf32> to vector<8x9x128xf32>
    %13 = vector.extract_strided_slice %11 {offsets = [0, 0, 128], sizes = [8, 9, 128], strides = [1, 1, 1]} : vector<8x9x256xf32> to vector<8x9x128xf32>
    %14 = vector.extract_strided_slice %12 {offsets = [0, 0, 0], sizes = [8, 8, 128], strides = [1, 1, 1]} : vector<8x9x128xf32> to vector<8x8x128xf32>
    %15 = vector.extract_strided_slice %13 {offsets = [0, 0, 0], sizes = [8, 8, 128], strides = [1, 1, 1]} : vector<8x9x128xf32> to vector<8x8x128xf32>
    %16 = arith.maximumf %14, %15 : vector<8x8x128xf32>
    %17 = vector.extract_strided_slice %12 {offsets = [0, 1, 0], sizes = [8, 8, 128], strides = [1, 1, 1]} : vector<8x9x128xf32> to vector<8x8x128xf32>
    %18 = arith.maximumf %16, %17 : vector<8x8x128xf32>
    %c0_3 = arith.constant 0 : index
    %c0_4 = arith.constant 0 : index
    %c0_5 = arith.constant 0 : index
    %c0_6 = arith.constant 0 : index
    %19 = vector.load %arg2[%c0_3, %c0_4, %c0_5, %c0_6] : memref<1x8x8x128xf32, #tpu.memory_space<vmem>>, vector<1x8x8x128xf32>
    %20 = vector.shape_cast %19 : vector<1x8x8x128xf32> to vector<8x8x128xf32>
    %21 = vector.shape_cast %18 : vector<8x8x128xf32> to vector<1x8x8x128xf32>
    tpu.vector_store %arg2[%c0_3, %c0_4, %c0_5, %c0_6], %21 {strides = array<i32>} : memref<1x8x8x128xf32, #tpu.memory_space<vmem>>, vector<1x8x8x128xf32>,
    return
  }
  func.func @transform_0(%arg0: i32) -> (i32, i32, i32, i32) {
    %c0_i32 = arith.constant 0 : i32
    %c0_i32_0 = arith.constant 0 : i32
    %c0_i32_1 = arith.constant 0 : i32
    %c0_i32_2 = arith.constant 0 : i32
    return %arg0, %c0_i32, %c0_i32_0, %c0_i32_1 : i32, i32, i32, i32
  }
  func.func @transform_1(%arg0: i32) -> (i32, i32, i32, i32) {
    %c0_i32 = arith.constant 0 : i32
    %c0_i32_0 = arith.constant 0 : i32
    %c0_i32_1 = arith.constant 0 : i32
    %c0_i32_2 = arith.constant 0 : i32
    return %arg0, %c0_i32, %c0_i32_0, %c0_i32_1 : i32, i32, i32, i32
  }
}

</mosaic_0001>

<llo_original>
// kernel: video_model_stem_forward.2
$region0: #{video_model_stem_forward.2}
  #allocation0 [shape = 'u32[]', space=smem, size = 0x4, offset = 0x4, fixed_abs, tag = 'smem constant byte address 0x4 - core index']
  #allocation1 [shape = 'u32[144,128]{1,0:T(1,128)}', space=vmem, size = 0x12000, scoped, tag = 'internal scratch']
  %s0 = inlined_call_operand.vmem [shape: bf16[2048,512], index: 0, kind: input, shape index: {}]
  %s1 = inlined_call_operand.vmem [shape: bf16[512,128], index: 1, kind: input, shape index: {}]
  %s2 = inlined_call_operand.vmem [shape: f32[1,128], index: 2, kind: input, shape index: {}]
  %s3 = inlined_call_operand.vmem [shape: f32[2048,128], index: 3, kind: output, shape index: {}]
  %s4 = sld [smem:[#allocation0]]
  $region45: #{video_model_stem_forward.2} parent=0
    _
  %s6 = ssub.s32 1, %s4
  %s7 = scalar_select 0, %s6, %s4
  loop: start=0, step=1, limit=6
  $region2: #{video_model_stem_forward.2} parent=0 // loop_pre_header
    _
  $region3: #{video_model_stem_forward.2} parent=0 // loop_header
    %s9 = sphi 0, %s13
    %p10 = scmp.ge.s32.totalorder %s9, 6
    %s19 = sphi 0, %s21
    %s22 = sphi 0, %s19
    %s23 = sphi 0, %s22
    %s39 = sphi 0, %s23
    %s43 = sphi 0, %s43
    %s45 = sphi 0, %s43
    %s46 = sphi 0, %s45
    %s60 = sphi 0, %s46
    %s64 = sphi 0, %s64
    %s66 = sphi 0, %s64
    %s67 = sphi 0, %s66
    %s81 = sphi 0, %s67
    %s87 = sphi 0, %s89
    %s90 = sphi 0, %s87
    %s91 = sphi 0, %s90
    %s107 = sphi 0, %s91
  $region4: #{video_model_stem_forward.2} parent=0 // loop_header_branch
    %12 = sbr.rel (%p10) target = $region8
  $region5: #{video_model_stem_forward.2} parent=0 // loop_body
    %s14 = ssub.s32 %s9, 1
    %s15 = ssub.s32 %s9, 2
    %s16 = sadd.s32 %s9, 1
    %s17 = ssub.s32 %s9, %s16
    %p18 = scmp.eq.s32.totalorder %s17, 0
    %s20 = sadd.s32 %s19, 1
    %s21 = scalar_select %p18, %s19, %s20
    %p24 = pneg %p18
    %p25 = scmp.eq.s32.totalorder %s9, 3
    %p26 = por %p24, %p25
    %p27 = scmp.ne.s32.totalorder %s19, %s22
    %p28 = scmp.eq.s32.totalorder %s9, 0
    %p29 = por %p27, %p28
    %p30 = scmp.ne.s32.totalorder %s19, %s22
    %p31 = scmp.eq.s32.totalorder %s14, 3
    %p32 = por %p30, %p31
    %p33 = scmp.ne.s32.totalorder %s22, %s23
    %p34 = scmp.eq.s32.totalorder %s14, 0
    %p35 = por %p33, %p34
    %p36 = scmp.ne.s32.totalorder %s22, %s23
    %p37 = scmp.eq.s32.totalorder %s15, 3
    %p38 = por %p36, %p37
    %p40 = scmp.ne.s32.totalorder %s23, %s39
    %p41 = scmp.eq.s32.totalorder %s15, 0
    %p42 = por %p40, %p41
    %s44 = sadd.s32 %s43, 1
    %p47 = scmp.eq.s32.totalorder %s9, 3
    %p48 = scmp.ne.s32.totalorder %s43, %s45
    %p49 = scmp.eq.s32.totalorder %s9, 0
    %p50 = por %p48, %p49
    %p51 = scmp.ne.s32.totalorder %s43, %s45
    %p52 = scmp.eq.s32.totalorder %s14, 3
    %p53 = por %p51, %p52
    %p54 = scmp.ne.s32.totalorder %s45, %s46
    %p55 = scmp.eq.s32.totalorder %s14, 0
    %p56 = por %p54, %p55
    %p57 = scmp.ne.s32.totalorder %s45, %s46
    %p58 = scmp.eq.s32.totalorder %s15, 3
    %p59 = por %p57, %p58
    %p61 = scmp.ne.s32.totalorder %s46, %s60
    %p62 = scmp.eq.s32.totalorder %s15, 0
    %p63 = por %p61, %p62
    %s65 = sadd.s32 %s64, 1
    %p68 = scmp.eq.s32.totalorder %s9, 3
    %p69 = scmp.ne.s32.totalorder %s64, %s66
    %p70 = scmp.eq.s32.totalorder %s9, 0
    %p71 = por %p69, %p70
    %p72 = scmp.ne.s32.totalorder %s64, %s66
    %p73 = scmp.eq.s32.totalorder %s14, 3
    %p74 = por %p72, %p73
    %p75 = scmp.ne.s32.totalorder %s66, %s67
    %p76 = scmp.eq.s32.totalorder %s14, 0
    %p77 = por %p75, %p76
    %p78 = scmp.ne.s32.totalorder %s66, %s67
    %p79 = scmp.eq.s32.totalorder %s15, 3
    %p80 = por %p78, %p79
    %p82 = scmp.ne.s32.totalorder %s67, %s81
    %p83 = scmp.eq.s32.totalorder %s15, 0
    %p84 = por %p82, %p83
    %s85 = ssub.s32 %s9, %s16
    %p86 = scmp.eq.s32.totalorder %s85, 0
    %s88 = sadd.s32 %s87, 1
    %s89 = scalar_select %p86, %s87, %s88
    %p92 = pneg %p86
    %p93 = scmp.eq.s32.totalorder %s9, 3
    %p94 = por %p92, %p93
    %p95 = scmp.ne.s32.totalorder %s87, %s90
    %p96 = scmp.eq.s32.totalorder %s9, 0
    %p97 = por %p95, %p96
    %p98 = scmp.ne.s32.totalorder %s87, %s90
    %p99 = scmp.eq.s32.totalorder %s14, 3
    %p100 = por %p98, %p99
    %p101 = scmp.ne.s32.totalorder %s90, %s91
    %p102 = scmp.eq.s32.totalorder %s14, 0
    %p103 = por %p101, %p102
    %p104 = scmp.ne.s32.totalorder %s90, %s91
    %p105 = scmp.eq.s32.totalorder %s15, 3
    %p106 = por %p104, %p105
    %p108 = scmp.ne.s32.totalorder %s91, %s107
    %p109 = scmp.eq.s32.totalorder %s15, 0
    %p110 = por %p108, %p109
    %p111 = scmp.le.s32.totalorder 1, %s9
    %p112 = scmp.lt.s32.totalorder %s9, 5
    %p113 = pnand %p111, %p112
    %p114 = pneg %p113
    // Predicated region
    $region9: #{video_model_stem_forward.2} parent=5 // pred_check
      _
    $region10: #{video_model_stem_forward.2} parent=5 // pred_check_branch
      %116 = sbr.rel (%p113) target = $region12
    $region11: #{video_model_stem_forward.2} parent=5 // pred_region
      %s117 = ssub.s32 %s9, 1
      // Predicated region
      $region13: #{video_model_stem_forward.2} parent=11 // pred_check
        %p118 = pneg %p56
      $region14: #{video_model_stem_forward.2} parent=11 // pred_check_branch
        %120 = sbr.rel (%p118) target = $region16
      $region15: #{video_model_stem_forward.2} parent=11 // pred_region
        _
      $region16: #{video_model_stem_forward.2} parent=11 // pred_fallthru
        _
      // Predicated region
      $region17: #{video_model_stem_forward.2} parent=11 // pred_check
        %p121 = pneg %p77
      $region18: #{video_model_stem_forward.2} parent=11 // pred_check_branch
        %123 = sbr.rel (%p121) target = $region20
      $region19: #{video_model_stem_forward.2} parent=11 // pred_region
        _
      $region20: #{video_model_stem_forward.2} parent=11 // pred_fallthru
        _
    $region12: #{video_model_stem_forward.2} parent=5 // pred_fallthru
      _
    %p124 = scmp.lt.s32.totalorder %s9, 4
    // Predicated region
    $region21: #{video_model_stem_forward.2} parent=5 // pred_check
      %p125 = pneg %p124
    $region22: #{video_model_stem_forward.2} parent=5 // pred_check_branch
      %127 = sbr.rel (%p125) target = $region24
    $region23: #{video_model_stem_forward.2} parent=5 // pred_region
      // Predicated region
      $region25: #{video_model_stem_forward.2} parent=23 // pred_check
        %p128 = pneg %p29
      $region26: #{video_model_stem_forward.2} parent=23 // pred_check_branch
        %130 = sbr.rel (%p128) target = $region28
      $region27: #{video_model_stem_forward.2} parent=23 // pred_region
        %s131 = smul.u32 64, %s9
        %p132 = scmp.lt.s32.totalorder %s131, 255
        %s133 = scalar_select %p132, %s131, 255
        %s134 = smul.addr %s133, 4
        %s135 = smul.addr %s134, 4
        %s136 = scalar_lea.vmem %s0, %s135
        %s137 = smul.u32 64, %s9
      $region28: #{video_model_stem_forward.2} parent=23 // pred_fallthru
        _
    $region24: #{video_model_stem_forward.2} parent=5 // pred_fallthru
      _
    %p138 = scmp.le.s32.totalorder 1, %s9
    %p139 = scmp.lt.s32.totalorder %s9, 5
    %p140 = pnand %p138, %p139
    %p141 = pneg %p140
    // Predicated region
    $region29: #{video_model_stem_forward.2} parent=5 // pred_check
      _
    $region30: #{video_model_stem_forward.2} parent=5 // pred_check_branch
      %143 = sbr.rel (%p140) target = $region32
    $region31: #{video_model_stem_forward.2} parent=5 // pred_region
      %s144 = ssub.s32 %s9, 1
      %s145 = smul.u32 64, %s14
      %p146 = scmp.lt.s32.totalorder %s145, 255
      %s147 = scalar_select %p146, %s145, 255
      %s148 = smul.addr %s147, 4
      %s149 = smul.addr %s148, 4
      %s150 = scalar_lea.vmem %s0, %s149
      %p151 = pneg %p35
      %p152 = pneg %p32
      %p153 = pneg %p56
      %p154 = pneg %p53
      %p155 = pneg %p77
      %p156 = pneg %p74
      %p157 = pneg %p103
      %p158 = pneg %p100
      %s159 = smul.u32 64, %s14
      %p160 = scmp.lt.s32.totalorder %s159, 255
      %s161 = scalar_select %p160, %s159, 255
      %s162 = smul.addr %s161, 8
      %s163 = scalar_lea.vmem %s3, %s162
      %s164 = smul.u32 64, %s14
      %p165 = scmp.lt.s32.totalorder %s164, 255
      %s166 = scalar_select %p165, %s164, 255
      %s167 = smul.addr %s166, 4
      %s168 = smul.addr %s167, 4
      %s169 = scalar_lea.vmem %s0, %s168
      %s170 = smul.u32 64, %s14
      %s171 = smul.u32 64, %s14
      %p172 = scmp.lt.s32.totalorder %s171, 255
      %s173 = scalar_select %p172, %s171, 255
      %s174 = smul.addr %s173, 8
      %s175 = scalar_lea.vmem %s3, %s174
      %s176 = smul.u32 64, %s14
      %v178 = vld [vmem:[%s169] sm:$0xff]
      %v179 = vld [vmem:[%s169 + $0x8] sm:$0xff]
      %v180 = vld [vmem:[%s169 + $0x10] sm:$0xff]
      %v181 = vld [vmem:[%s169 + $0x18] sm:$0xff]
      %v182 = vld [vmem:[%s169 + $0x20] sm:$0xff]
      %v183 = vld [vmem:[%s169 + $0x28] sm:$0xff]
      %v184 = vld [vmem:[%s169 + $0x30] sm:$0xff]
      %v185 = vld [vmem:[%s169 + $0x38] sm:$0xff]
      %v186 = vld [vmem:[%s169 + $0x40] sm:$0xff]
      %v187 = vld [vmem:[%s169 + $0x48] sm:$0xff]
      %v188 = vld [vmem:[%s169 + $0x50] sm:$0xff]
      %v189 = vld [vmem:[%s169 + $0x58] sm:$0xff]
      %v190 = vld [vmem:[%s169 + $0x60] sm:$0xff]
      %v191 = vld [vmem:[%s169 + $0x68] sm:$0xff]
      %v192 = vld [vmem:[%s169 + $0x70] sm:$0xff]
      %v193 = vld [vmem:[%s169 + $0x78] sm:$0xff]
      %v194 = vld [vmem:[%s169 + $0x80] sm:$0xff]
      %v195 = vld [vmem:[%s169 + $0x88] sm:$0xff]
      %v196 = vld [vmem:[%s169 + $0x90] sm:$0xff]
      %v197 = vld [vmem:[%s169 + $0x98] sm:$0xff]
      %v198 = vld [vmem:[%s169 + $0xa0] sm:$0xff]
      %v199 = vld [vmem:[%s169 + $0xa8] sm:$0xff]
      %v200 = vld [vmem:[%s169 + $0xb0] sm:$0xff]
      %v201 = vld [vmem:[%s169 + $0xb8] sm:$0xff]
      %v202 = vld [vmem:[%s169 + $0xc0] sm:$0xff]
      %v203 = vld [vmem:[%s169 + $0xc8] sm:$0xff]
      %v204 = vld [vmem:[%s169 + $0xd0] sm:$0xff]
      %v205 = vld [vmem:[%s169 + $0xd8] sm:$0xff]
      %v206 = vld [vmem:[%s169 + $0xe0] sm:$0xff]
      %v207 = vld [vmem:[%s169 + $0xe8] sm:$0xff]
      %v208 = vld [vmem:[%s169 + $0xf0] sm:$0xff]
      %v209 = vld [vmem:[%s169 + $0xf8] sm:$0xff]
      %v210 = vld [vmem:[%s169 + $0x100] sm:$0xff]
      %v211 = vld [vmem:[%s169 + $0x108] sm:$0xff]
      %v212 = vld [vmem:[%s169 + $0x110] sm:$0xff]
      %v213 = vld [vmem:[%s169 + $0x118] sm:$0xff]
      %v214 = vld [vmem:[%s169 + $0x120] sm:$0xff]
      %v215 = vld [vmem:[%s169 + $0x128] sm:$0xff]
      %v216 = vld [vmem:[%s169 + $0x130] sm:$0xff]
      %v217 = vld [vmem:[%s169 + $0x138] sm:$0xff]
      %v218 = vld [vmem:[%s169 + $0x140] sm:$0xff]
      %v219 = vld [vmem:[%s169 + $0x148] sm:$0xff]
      %v220 = vld [vmem:[%s169 + $0x150] sm:$0xff]
      %v221 = vld [vmem:[%s169 + $0x158] sm:$0xff]
      %v222 = vld [vmem:[%s169 + $0x160] sm:$0xff]
      %v223 = vld [vmem:[%s169 + $0x168] sm:$0xff]
      %v224 = vld [vmem:[%s169 + $0x170] sm:$0xff]
      %v225 = vld [vmem:[%s169 + $0x178] sm:$0xff]
      %v226 = vld [vmem:[%s169 + $0x180] sm:$0xff]
      %v227 = vld [vmem:[%s169 + $0x188] sm:$0xff]
      %v228 = vld [vmem:[%s169 + $0x190] sm:$0xff]
      %v229 = vld [vmem:[%s169 + $0x198] sm:$0xff]
      %v230 = vld [vmem:[%s169 + $0x1a0] sm:$0xff]
      %v231 = vld [vmem:[%s169 + $0x1a8] sm:$0xff]
      %v232 = vld [vmem:[%s169 + $0x1b0] sm:$0xff]
      %v233 = vld [vmem:[%s169 + $0x1b8] sm:$0xff]
      %v234 = vld [vmem:[%s169 + $0x1c0] sm:$0xff]
      %v235 = vld [vmem:[%s169 + $0x1c8] sm:$0xff]
      %v236 = vld [vmem:[%s169 + $0x1d0] sm:$0xff]
      %v237 = vld [vmem:[%s169 + $0x1d8] sm:$0xff]
      %v238 = vld [vmem:[%s169 + $0x1e0] sm:$0xff]
      %v239 = vld [vmem:[%s169 + $0x1e8] sm:$0xff]
      %v240 = vld [vmem:[%s169 + $0x1f0] sm:$0xff]
      %v241 = vld [vmem:[%s169 + $0x1f8] sm:$0xff]
      %v242 = vld [vmem:[%s169 + $0x200] sm:$0xff]
      %v243 = vld [vmem:[%s169 + $0x208] sm:$0xff]
      %v244 = vld [vmem:[%s169 + $0x210] sm:$0xff]
      %v245 = vld [vmem:[%s169 + $0x218] sm:$0xff]
      %v246 = vld [vmem:[%s169 + $0x220] sm:$0xff]
      %v247 = vld [vmem:[%s169 + $0x228] sm:$0xff]
      %v248 = vld [vmem:[%s169 + $0x230] sm:$0xff]
      %v249 = vld [vmem:[%s169 + $0x238] sm:$0xff]
      %v250 = vld [vmem:[%s169 + $0x240] sm:$0xff]
      %v251 = vld [vmem:[%s169 + $0x248] sm:$0xff]
      %v252 = vld [vmem:[%s169 + $0x250] sm:$0xff]
      %v253 = vld [vmem:[%s169 + $0x258] sm:$0xff]
      %v254 = vld [vmem:[%s169 + $0x260] sm:$0xff]
      %v255 = vld [vmem:[%s169 + $0x268] sm:$0xff]
      %v256 = vld [vmem:[%s169 + $0x270] sm:$0xff]
      %v257 = vld [vmem:[%s169 + $0x278] sm:$0xff]
      %v258 = vld [vmem:[%s169 + $0x280] sm:$0xff]
      %v259 = vld [vmem:[%s169 + $0x288] sm:$0xff]
      %v260 = vld [vmem:[%s169 + $0x290] sm:$0xff]
      %v261 = vld [vmem:[%s169 + $0x298] sm:$0xff]
      %v262 = vld [vmem:[%s169 + $0x2a0] sm:$0xff]
      %v263 = vld [vmem:[%s169 + $0x2a8] sm:$0xff]
      %v264 = vld [vmem:[%s169 + $0x2b0] sm:$0xff]
      %v265 = vld [vmem:[%s169 + $0x2b8] sm:$0xff]
      %v266 = vld [vmem:[%s169 + $0x2c0] sm:$0xff]
      %v267 = vld [vmem:[%s169 + $0x2c8] sm:$0xff]
      %v268 = vld [vmem:[%s169 + $0x2d0] sm:$0xff]
      %v269 = vld [vmem:[%s169 + $0x2d8] sm:$0xff]
      %v270 = vld [vmem:[%s169 + $0x2e0] sm:$0xff]
      %v271 = vld [vmem:[%s169 + $0x2e8] sm:$0xff]
      %v272 = vld [vmem:[%s169 + $0x2f0] sm:$0xff]
      %v273 = vld [vmem:[%s169 + $0x2f8] sm:$0xff]
      %v274 = vld [vmem:[%s169 + $0x300] sm:$0xff]
      %v275 = vld [vmem:[%s169 + $0x308] sm:$0xff]
      %v276 = vld [vmem:[%s169 + $0x310] sm:$0xff]
      %v277 = vld [vmem:[%s169 + $0x318] sm:$0xff]
      %v278 = vld [vmem:[%s169 + $0x320] sm:$0xff]
      %v279 = vld [vmem:[%s169 + $0x328] sm:$0xff]
      %v280 = vld [vmem:[%s169 + $0x330] sm:$0xff]
      %v281 = vld [vmem:[%s169 + $0x338] sm:$0xff]
      %v282 = vld [vmem:[%s169 + $0x340] sm:$0xff]
      %v283 = vld [vmem:[%s169 + $0x348] sm:$0xff]
      %v284 = vld [vmem:[%s169 + $0x350] sm:$0xff]
      %v285 = vld [vmem:[%s169 + $0x358] sm:$0xff]
      %v286 = vld [vmem:[%s169 + $0x360] sm:$0xff]
      %v287 = vld [vmem:[%s169 + $0x368] sm:$0xff]
      %v288 = vld [vmem:[%s169 + $0x370] sm:$0xff]
      %v289 = vld [vmem:[%s169 + $0x378] sm:$0xff]
      %v290 = vld [vmem:[%s169 + $0x380] sm:$0xff]
      %v291 = vld [vmem:[%s169 + $0x388] sm:$0xff]
      %v292 = vld [vmem:[%s169 + $0x390] sm:$0xff]
      %v293 = vld [vmem:[%s169 + $0x398] sm:$0xff]
      %v294 = vld [vmem:[%s169 + $0x3a0] sm:$0xff]
      %v295 = vld [vmem:[%s169 + $0x3a8] sm:$0xff]
      %v296 = vld [vmem:[%s169 + $0x3b0] sm:$0xff]
      %v297 = vld [vmem:[%s169 + $0x3b8] sm:$0xff]
      %v298 = vld [vmem:[%s169 + $0x3c0] sm:$0xff]
      %v299 = vld [vmem:[%s169 + $0x3c8] sm:$0xff]
      %v300 = vld [vmem:[%s169 + $0x3d0] sm:$0xff]
      %v301 = vld [vmem:[%s169 + $0x3d8] sm:$0xff]
      %v302 = vld [vmem:[%s169 + $0x3e0] sm:$0xff]
      %v303 = vld [vmem:[%s169 + $0x3e8] sm:$0xff]
      %v304 = vld [vmem:[%s169 + $0x3f0] sm:$0xff]
      %v305 = vld [vmem:[%s169 + $0x3f8] sm:$0xff]
      %v306 = vld [vmem:[%s1] sm:$0xf]
      %v307 = vld [vmem:[%s1 + $0x4] sm:$0xf]
      %v308 = vld [vmem:[%s1 + $0x8] sm:$0xf]
      %v309 = vld [vmem:[%s1 + $0xc] sm:$0xf]
      %v310 = vld [vmem:[%s1 + $0x10] sm:$0xf]
      %v311 = vld [vmem:[%s1 + $0x14] sm:$0xf]
      %v312 = vld [vmem:[%s1 + $0x18] sm:$0xf]
      %v313 = vld [vmem:[%s1 + $0x1c] sm:$0xf]
      %v314 = vld [vmem:[%s1 + $0x20] sm:$0xf]
      %v315 = vld [vmem:[%s1 + $0x24] sm:$0xf]
      %v316 = vld [vmem:[%s1 + $0x28] sm:$0xf]
      %v317 = vld [vmem:[%s1 + $0x2c] sm:$0xf]
      %v318 = vld [vmem:[%s1 + $0x30] sm:$0xf]
      %v319 = vld [vmem:[%s1 + $0x34] sm:$0xf]
      %v320 = vld [vmem:[%s1 + $0x38] sm:$0xf]
      %v321 = vld [vmem:[%s1 + $0x3c] sm:$0xf]
      %v322 = vld [vmem:[%s1 + $0x40] sm:$0xf]
      %v323 = vld [vmem:[%s1 + $0x44] sm:$0xf]
      %v324 = vld [vmem:[%s1 + $0x48] sm:$0xf]
      %v325 = vld [vmem:[%s1 + $0x4c] sm:$0xf]
      %v326 = vld [vmem:[%s1 + $0x50] sm:$0xf]
      %v327 = vld [vmem:[%s1 + $0x54] sm:$0xf]
      %v328 = vld [vmem:[%s1 + $0x58] sm:$0xf]
      %v329 = vld [vmem:[%s1 + $0x5c] sm:$0xf]
      %v330 = vld [vmem:[%s1 + $0x60] sm:$0xf]
      %v331 = vld [vmem:[%s1 + $0x64] sm:$0xf]
      %v332 = vld [vmem:[%s1 + $0x68] sm:$0xf]
      %v333 = vld [vmem:[%s1 + $0x6c] sm:$0xf]
      %v334 = vld [vmem:[%s1 + $0x70] sm:$0xf]
      %v335 = vld [vmem:[%s1 + $0x74] sm:$0xf]
      %v336 = vld [vmem:[%s1 + $0x78] sm:$0xf]
      %v337 = vld [vmem:[%s1 + $0x7c] sm:$0xf]
      %v338 = vld [vmem:[%s1 + $0x80] sm:$0xf]
      %v339 = vld [vmem:[%s1 + $0x84] sm:$0xf]
      %v340 = vld [vmem:[%s1 + $0x88] sm:$0xf]
      %v341 = vld [vmem:[%s1 + $0x8c] sm:$0xf]
      %v342 = vld [vmem:[%s1 + $0x90] sm:$0xf]
      %v343 = vld [vmem:[%s1 + $0x94] sm:$0xf]
      %v344 = vld [vmem:[%s1 + $0x98] sm:$0xf]
      %v345 = vld [vmem:[%s1 + $0x9c] sm:$0xf]
      %v346 = vld [vmem:[%s1 + $0xa0] sm:$0xf]
      %v347 = vld [vmem:[%s1 + $0xa4] sm:$0xf]
      %v348 = vld [vmem:[%s1 + $0xa8] sm:$0xf]
      %v349 = vld [vmem:[%s1 + $0xac] sm:$0xf]
      %v350 = vld [vmem:[%s1 + $0xb0] sm:$0xf]
      %v351 = vld [vmem:[%s1 + $0xb4] sm:$0xf]
      %v352 = vld [vmem:[%s1 + $0xb8] sm:$0xf]
      %v353 = vld [vmem:[%s1 + $0xbc] sm:$0xf]
      %v354 = vld [vmem:[%s1 + $0xc0] sm:$0xf]
      %v355 = vld [vmem:[%s1 + $0xc4] sm:$0xf]
      %v356 = vld [vmem:[%s1 + $0xc8] sm:$0xf]
      %v357 = vld [vmem:[%s1 + $0xcc] sm:$0xf]
      %v358 = vld [vmem:[%s1 + $0xd0] sm:$0xf]
      %v359 = vld [vmem:[%s1 + $0xd4] sm:$0xf]
      %v360 = vld [vmem:[%s1 + $0xd8] sm:$0xf]
      %v361 = vld [vmem:[%s1 + $0xdc] sm:$0xf]
      %v362 = vld [vmem:[%s1 + $0xe0] sm:$0xf]
      %v363 = vld [vmem:[%s1 + $0xe4] sm:$0xf]
      %v364 = vld [vmem:[%s1 + $0xe8] sm:$0xf]
      %v365 = vld [vmem:[%s1 + $0xec] sm:$0xf]
      %v366 = vld [vmem:[%s1 + $0xf0] sm:$0xf]
      %v367 = vld [vmem:[%s1 + $0xf4] sm:$0xf]
      %v368 = vld [vmem:[%s1 + $0xf8] sm:$0xf]
      %v369 = vld [vmem:[%s1 + $0xfc] sm:$0xf]
      %v370 = vld [vmem:[%s2] sm:$0x1]
      %v372 = vlaneseq
      %v373 = vshrl.u32 %v372, 7
      %v374 = vsub.s32 0, %v373
      %v375 = vrot.slane %v370, %v374
      %v505 = vunpack.c.l.b16 %v178
      %v506 = vunpack.c.h.b16 %v178
      %v507 = vunpack.c.l.b16 %v179
      %v508 = vunpack.c.h.b16 %v179
      %v509 = vunpack.c.l.b16 %v180
      %v510 = vunpack.c.h.b16 %v180
      %v511 = vunpack.c.l.b16 %v181
      %v512 = vunpack.c.h.b16 %v181
      %v513 = vunpack.c.l.b16 %v182
      %v514 = vunpack.c.h.b16 %v182
      %v515 = vunpack.c.l.b16 %v183
      %v516 = vunpack.c.h.b16 %v183
      %v517 = vunpack.c.l.b16 %v184
      %v518 = vunpack.c.h.b16 %v184
      %v519 = vunpack.c.l.b16 %v185
      %v520 = vunpack.c.h.b16 %v185
      %v521 = vunpack.c.l.b16 %v186
      %v522 = vunpack.c.h.b16 %v186
      %v523 = vunpack.c.l.b16 %v187
      %v524 = vunpack.c.h.b16 %v187
      %v525 = vunpack.c.l.b16 %v188
      %v526 = vunpack.c.h.b16 %v188
      %v527 = vunpack.c.l.b16 %v189
      %v528 = vunpack.c.h.b16 %v189
      %v529 = vunpack.c.l.b16 %v190
      %v530 = vunpack.c.h.b16 %v190
      %v531 = vunpack.c.l.b16 %v191
      %v532 = vunpack.c.h.b16 %v191
      %v533 = vunpack.c.l.b16 %v192
      %v534 = vunpack.c.h.b16 %v192
      %v535 = vunpack.c.l.b16 %v193
      %v536 = vunpack.c.h.b16 %v193
      %v537 = vunpack.c.l.b16 %v194
      %v538 = vunpack.c.h.b16 %v194
      %v539 = vunpack.c.l.b16 %v195
      %v540 = vunpack.c.h.b16 %v195
      %v541 = vunpack.c.l.b16 %v196
      %v542 = vunpack.c.h.b16 %v196
      %v543 = vunpack.c.l.b16 %v197
      %v544 = vunpack.c.h.b16 %v197
      %v545 = vunpack.c.l.b16 %v198
      %v546 = vunpack.c.h.b16 %v198
      %v547 = vunpack.c.l.b16 %v199
      %v548 = vunpack.c.h.b16 %v199
      %v549 = vunpack.c.l.b16 %v200
      %v550 = vunpack.c.h.b16 %v200
      %v551 = vunpack.c.l.b16 %v201
      %v552 = vunpack.c.h.b16 %v201
      %v553 = vunpack.c.l.b16 %v202
      %v554 = vunpack.c.h.b16 %v202
      %v555 = vunpack.c.l.b16 %v203
      %v556 = vunpack.c.h.b16 %v203
      %v557 = vunpack.c.l.b16 %v204
      %v558 = vunpack.c.h.b16 %v204
      %v559 = vunpack.c.l.b16 %v205
      %v560 = vunpack.c.h.b16 %v205
      %v561 = vunpack.c.l.b16 %v206
      %v562 = vunpack.c.h.b16 %v206
      %v563 = vunpack.c.l.b16 %v207
      %v564 = vunpack.c.h.b16 %v207
      %v565 = vunpack.c.l.b16 %v208
      %v566 = vunpack.c.h.b16 %v208
      %v567 = vunpack.c.l.b16 %v209
      %v568 = vunpack.c.h.b16 %v209
      %v569 = vunpack.c.l.b16 %v210
      %v570 = vunpack.c.h.b16 %v210
      %v571 = vunpack.c.l.b16 %v211
      %v572 = vunpack.c.h.b16 %v211
      %v573 = vunpack.c.l.b16 %v212
      %v574 = vunpack.c.h.b16 %v212
      %v575 = vunpack.c.l.b16 %v213
      %v576 = vunpack.c.h.b16 %v213
      %v577 = vunpack.c.l.b16 %v214
      %v578 = vunpack.c.h.b16 %v214
      %v579 = vunpack.c.l.b16 %v215
      %v580 = vunpack.c.h.b16 %v215
      %v581 = vunpack.c.l.b16 %v216
      %v582 = vunpack.c.h.b16 %v216
      %v583 = vunpack.c.l.b16 %v217
      %v584 = vunpack.c.h.b16 %v217
      %v585 = vunpack.c.l.b16 %v218
      %v586 = vunpack.c.h.b16 %v218
      %v587 = vunpack.c.l.b16 %v219
      %v588 = vunpack.c.h.b16 %v219
      %v589 = vunpack.c.l.b16 %v220
      %v590 = vunpack.c.h.b16 %v220
      %v591 = vunpack.c.l.b16 %v221
      %v592 = vunpack.c.h.b16 %v221
      %v593 = vunpack.c.l.b16 %v222
      %v594 = vunpack.c.h.b16 %v222
      %v595 = vunpack.c.l.b16 %v223
      %v596 = vunpack.c.h.b16 %v223
      %v597 = vunpack.c.l.b16 %v224
      %v598 = vunpack.c.h.b16 %v224
      %v599 = vunpack.c.l.b16 %v225
      %v600 = vunpack.c.h.b16 %v225
      %v601 = vunpack.c.l.b16 %v226
      %v602 = vunpack.c.h.b16 %v226
      %v603 = vunpack.c.l.b16 %v227
      %v604 = vunpack.c.h.b16 %v227
      %v605 = vunpack.c.l.b16 %v228
      %v606 = vunpack.c.h.b16 %v228
      %v607 = vunpack.c.l.b16 %v229
      %v608 = vunpack.c.h.b16 %v229
      %v609 = vunpack.c.l.b16 %v230
      %v610 = vunpack.c.h.b16 %v230
      %v611 = vunpack.c.l.b16 %v231
      %v612 = vunpack.c.h.b16 %v231
      %v613 = vunpack.c.l.b16 %v232
      %v614 = vunpack.c.h.b16 %v232
      %v615 = vunpack.c.l.b16 %v233
      %v616 = vunpack.c.h.b16 %v233
      %v617 = vunpack.c.l.b16 %v234
      %v618 = vunpack.c.h.b16 %v234
      %v619 = vunpack.c.l.b16 %v235
      %v620 = vunpack.c.h.b16 %v235
      %v621 = vunpack.c.l.b16 %v236
      %v622 = vunpack.c.h.b16 %v236
      %v623 = vunpack.c.l.b16 %v237
      %v624 = vunpack.c.h.b16 %v237
      %v625 = vunpack.c.l.b16 %v238
      %v626 = vunpack.c.h.b16 %v238
      %v627 = vunpack.c.l.b16 %v239
      %v628 = vunpack.c.h.b16 %v239
      %v629 = vunpack.c.l.b16 %v240
      %v630 = vunpack.c.h.b16 %v240
      %v631 = vunpack.c.l.b16 %v241
      %v632 = vunpack.c.h.b16 %v241
      %v633 = vunpack.c.l.b16 %v242
      %v634 = vunpack.c.h.b16 %v242
      %v635 = vunpack.c.l.b16 %v243
      %v636 = vunpack.c.h.b16 %v243
      %v637 = vunpack.c.l.b16 %v244
      %v638 = vunpack.c.h.b16 %v244
      %v639 = vunpack.c.l.b16 %v245
      %v640 = vunpack.c.h.b16 %v245
      %v641 = vunpack.c.l.b16 %v246
      %v642 = vunpack.c.h.b16 %v246
      %v643 = vunpack.c.l.b16 %v247
      %v644 = vunpack.c.h.b16 %v247
      %v645 = vunpack.c.l.b16 %v248
      %v646 = vunpack.c.h.b16 %v248
      %v647 = vunpack.c.l.b16 %v249
      %v648 = vunpack.c.h.b16 %v249
      %v649 = vunpack.c.l.b16 %v250
      %v650 = vunpack.c.h.b16 %v250
      %v651 = vunpack.c.l.b16 %v251
      %v652 = vunpack.c.h.b16 %v251
      %v653 = vunpack.c.l.b16 %v252
      %v654 = vunpack.c.h.b16 %v252
      %v655 = vunpack.c.l.b16 %v253
      %v656 = vunpack.c.h.b16 %v253
      %v657 = vunpack.c.l.b16 %v254
      %v658 = vunpack.c.h.b16 %v254
      %v659 = vunpack.c.l.b16 %v255
      %v660 = vunpack.c.h.b16 %v255
      %v661 = vunpack.c.l.b16 %v256
      %v662 = vunpack.c.h.b16 %v256
      %v663 = vunpack.c.l.b16 %v257
      %v664 = vunpack.c.h.b16 %v257
      %v665 = vunpack.c.l.b16 %v258
      %v666 = vunpack.c.h.b16 %v258
      %v667 = vunpack.c.l.b16 %v259
      %v668 = vunpack.c.h.b16 %v259
      %v669 = vunpack.c.l.b16 %v260
      %v670 = vunpack.c.h.b16 %v260
      %v671 = vunpack.c.l.b16 %v261
      %v672 = vunpack.c.h.b16 %v261
      %v673 = vunpack.c.l.b16 %v262
      %v674 = vunpack.c.h.b16 %v262
      %v675 = vunpack.c.l.b16 %v263
      %v676 = vunpack.c.h.b16 %v263
      %v677 = vunpack.c.l.b16 %v264
      %v678 = vunpack.c.h.b16 %v264
      %v679 = vunpack.c.l.b16 %v265
      %v680 = vunpack.c.h.b16 %v265
      %v681 = vunpack.c.l.b16 %v266
      %v682 = vunpack.c.h.b16 %v266
      %v683 = vunpack.c.l.b16 %v267
      %v684 = vunpack.c.h.b16 %v267
      %v685 = vunpack.c.l.b16 %v268
      %v686 = vunpack.c.h.b16 %v268
      %v687 = vunpack.c.l.b16 %v269
      %v688 = vunpack.c.h.b16 %v269
      %v689 = vunpack.c.l.b16 %v270
      %v690 = vunpack.c.h.b16 %v270
      %v691 = vunpack.c.l.b16 %v271
      %v692 = vunpack.c.h.b16 %v271
      %v693 = vunpack.c.l.b16 %v272
      %v694 = vunpack.c.h.b16 %v272
      %v695 = vunpack.c.l.b16 %v273
      %v696 = vunpack.c.h.b16 %v273
      %v697 = vunpack.c.l.b16 %v274
      %v698 = vunpack.c.h.b16 %v274
      %v699 = vunpack.c.l.b16 %v275
      %v700 = vunpack.c.h.b16 %v275
      %v701 = vunpack.c.l.b16 %v276
      %v702 = vunpack.c.h.b16 %v276
      %v703 = vunpack.c.l.b16 %v277
      %v704 = vunpack.c.h.b16 %v277
      %v705 = vunpack.c.l.b16 %v278
      %v706 = vunpack.c.h.b16 %v278
      %v707 = vunpack.c.l.b16 %v279
      %v708 = vunpack.c.h.b16 %v279
      %v709 = vunpack.c.l.b16 %v280
      %v710 = vunpack.c.h.b16 %v280
      %v711 = vunpack.c.l.b16 %v281
      %v712 = vunpack.c.h.b16 %v281
      %v713 = vunpack.c.l.b16 %v282
      %v714 = vunpack.c.h.b16 %v282
      %v715 = vunpack.c.l.b16 %v283
      %v716 = vunpack.c.h.b16 %v283
      %v717 = vunpack.c.l.b16 %v284
      %v718 = vunpack.c.h.b16 %v284
      %v719 = vunpack.c.l.b16 %v285
      %v720 = vunpack.c.h.b16 %v285
      %v721 = vunpack.c.l.b16 %v286
      %v722 = vunpack.c.h.b16 %v286
      %v723 = vunpack.c.l.b16 %v287
      %v724 = vunpack.c.h.b16 %v287
      %v725 = vunpack.c.l.b16 %v288
      %v726 = vunpack.c.h.b16 %v288
      %v727 = vunpack.c.l.b16 %v289
      %v728 = vunpack.c.h.b16 %v289
      %v729 = vunpack.c.l.b16 %v290
      %v730 = vunpack.c.h.b16 %v290
      %v731 = vunpack.c.l.b16 %v291
      %v732 = vunpack.c.h.b16 %v291
      %v733 = vunpack.c.l.b16 %v292
      %v734 = vunpack.c.h.b16 %v292
      %v735 = vunpack.c.l.b16 %v293
      %v736 = vunpack.c.h.b16 %v293
      %v737 = vunpack.c.l.b16 %v294
      %v738 = vunpack.c.h.b16 %v294
      %v739 = vunpack.c.l.b16 %v295
      %v740 = vunpack.c.h.b16 %v295
      %v741 = vunpack.c.l.b16 %v296
      %v742 = vunpack.c.h.b16 %v296
      %v743 = vunpack.c.l.b16 %v297
      %v744 = vunpack.c.h.b16 %v297
      %v745 = vunpack.c.l.b16 %v298
      %v746 = vunpack.c.h.b16 %v298
      %v747 = vunpack.c.l.b16 %v299
      %v748 = vunpack.c.h.b16 %v299
      %v749 = vunpack.c.l.b16 %v300
      %v750 = vunpack.c.h.b16 %v300
      %v751 = vunpack.c.l.b16 %v301
      %v752 = vunpack.c.h.b16 %v301
      %v753 = vunpack.c.l.b16 %v302
      %v754 = vunpack.c.h.b16 %v302
      %v755 = vunpack.c.l.b16 %v303
      %v756 = vunpack.c.h.b16 %v303
      %v757 = vunpack.c.l.b16 %v304
      %v758 = vunpack.c.h.b16 %v304
      %v759 = vunpack.c.l.b16 %v305
      %v760 = vunpack.c.h.b16 %v305
      %v761 = vpack.c.b16 %v509, %v505
      %v762 = vpack.c.b16 %v510, %v506
      %v763 = vpack.c.b16 %v511, %v507
      %v764 = vpack.c.b16 %v512, %v508
      %v765 = vpack.c.b16 %v517, %v513
      %v766 = vpack.c.b16 %v518, %v514
      %v767 = vpack.c.b16 %v519, %v515
      %v768 = vpack.c.b16 %v520, %v516
      %v769 = vpack.c.b16 %v525, %v521
      %v770 = vpack.c.b16 %v526, %v522
      %v771 = vpack.c.b16 %v527, %v523
      %v772 = vpack.c.b16 %v528, %v524
      %v773 = vpack.c.b16 %v533, %v529
      %v774 = vpack.c.b16 %v534, %v530
      %v775 = vpack.c.b16 %v535, %v531
      %v776 = vpack.c.b16 %v536, %v532
      %v777 = vpack.c.b16 %v541, %v537
      %v778 = vpack.c.b16 %v542, %v538
      %v779 = vpack.c.b16 %v543, %v539
      %v780 = vpack.c.b16 %v544, %v540
      %v781 = vpack.c.b16 %v549, %v545
      %v782 = vpack.c.b16 %v550, %v546
      %v783 = vpack.c.b16 %v551, %v547
      %v784 = vpack.c.b16 %v552, %v548
      %v785 = vpack.c.b16 %v557, %v553
      %v786 = vpack.c.b16 %v558, %v554
      %v787 = vpack.c.b16 %v559, %v555
      %v788 = vpack.c.b16 %v560, %v556
      %v789 = vpack.c.b16 %v565, %v561
      %v790 = vpack.c.b16 %v566, %v562
      %v791 = vpack.c.b16 %v567, %v563
      %v792 = vpack.c.b16 %v568, %v564
      %v793 = vpack.c.b16 %v573, %v569
      %v794 = vpack.c.b16 %v574, %v570
      %v795 = vpack.c.b16 %v575, %v571
      %v796 = vpack.c.b16 %v576, %v572
      %v797 = vpack.c.b16 %v581, %v577
      %v798 = vpack.c.b16 %v582, %v578
      %v799 = vpack.c.b16 %v583, %v579
      %v800 = vpack.c.b16 %v584, %v580
      %v801 = vpack.c.b16 %v589, %v585
      %v802 = vpack.c.b16 %v590, %v586
      %v803 = vpack.c.b16 %v591, %v587
      %v804 = vpack.c.b16 %v592, %v588
      %v805 = vpack.c.b16 %v597, %v593
      %v806 = vpack.c.b16 %v598, %v594
      %v807 = vpack.c.b16 %v599, %v595
      %v808 = vpack.c.b16 %v600, %v596
      %v809 = vpack.c.b16 %v605, %v601
      %v810 = vpack.c.b16 %v606, %v602
      %v811 = vpack.c.b16 %v607, %v603
      %v812 = vpack.c.b16 %v608, %v604
      %v813 = vpack.c.b16 %v613, %v609
      %v814 = vpack.c.b16 %v614, %v610
      %v815 = vpack.c.b16 %v615, %v611
      %v816 = vpack.c.b16 %v616, %v612
      %v817 = vpack.c.b16 %v621, %v617
      %v818 = vpack.c.b16 %v622, %v618
      %v819 = vpack.c.b16 %v623, %v619
      %v820 = vpack.c.b16 %v624, %v620
      %v821 = vpack.c.b16 %v629, %v625
      %v822 = vpack.c.b16 %v630, %v626
      %v823 = vpack.c.b16 %v631, %v627
      %v824 = vpack.c.b16 %v632, %v628
      %v825 = vpack.c.b16 %v637, %v633
      %v826 = vpack.c.b16 %v638, %v634
      %v827 = vpack.c.b16 %v639, %v635
      %v828 = vpack.c.b16 %v640, %v636
      %v829 = vpack.c.b16 %v645, %v641
      %v830 = vpack.c.b16 %v646, %v642
      %v831 = vpack.c.b16 %v647, %v643
      %v832 = vpack.c.b16 %v648, %v644
      %v833 = vpack.c.b16 %v653, %v649
      %v834 = vpack.c.b16 %v654, %v650
      %v835 = vpack.c.b16 %v655, %v651
      %v836 = vpack.c.b16 %v656, %v652
      %v837 = vpack.c.b16 %v661, %v657
      %v838 = vpack.c.b16 %v662, %v658
      %v839 = vpack.c.b16 %v663, %v659
      %v840 = vpack.c.b16 %v664, %v660
      %v841 = vpack.c.b16 %v669, %v665
      %v842 = vpack.c.b16 %v670, %v666
      %v843 = vpack.c.b16 %v671, %v667
      %v844 = vpack.c.b16 %v672, %v668
      %v845 = vpack.c.b16 %v677, %v673
      %v846 = vpack.c.b16 %v678, %v674
      %v847 = vpack.c.b16 %v679, %v675
      %v848 = vpack.c.b16 %v680, %v676
      %v849 = vpack.c.b16 %v685, %v681
      %v850 = vpack.c.b16 %v686, %v682
      %v851 = vpack.c.b16 %v687, %v683
      %v852 = vpack.c.b16 %v688, %v684
      %v853 = vpack.c.b16 %v693, %v689
      %v854 = vpack.c.b16 %v694, %v690
      %v855 = vpack.c.b16 %v695, %v691
      %v856 = vpack.c.b16 %v696, %v692
      %v857 = vpack.c.b16 %v701, %v697
      %v858 = vpack.c.b16 %v702, %v698
      %v859 = vpack.c.b16 %v703, %v699
      %v860 = vpack.c.b16 %v704, %v700
      %v861 = vpack.c.b16 %v709, %v705
      %v862 = vpack.c.b16 %v710, %v706
      %v863 = vpack.c.b16 %v711, %v707
      %v864 = vpack.c.b16 %v712, %v708
      %v865 = vpack.c.b16 %v717, %v713
      %v866 = vpack.c.b16 %v718, %v714
      %v867 = vpack.c.b16 %v719, %v715
      %v868 = vpack.c.b16 %v720, %v716
      %v869 = vpack.c.b16 %v725, %v721
      %v870 = vpack.c.b16 %v726, %v722
      %v871 = vpack.c.b16 %v727, %v723
      %v872 = vpack.c.b16 %v728, %v724
      %v873 = vpack.c.b16 %v733, %v729
      %v874 = vpack.c.b16 %v734, %v730
      %v875 = vpack.c.b16 %v735, %v731
      %v876 = vpack.c.b16 %v736, %v732
      %v877 = vpack.c.b16 %v741, %v737
      %v878 = vpack.c.b16 %v742, %v738
      %v879 = vpack.c.b16 %v743, %v739
      %v880 = vpack.c.b16 %v744, %v740
      %v881 = vpack.c.b16 %v749, %v745
      %v882 = vpack.c.b16 %v750, %v746
      %v883 = vpack.c.b16 %v751, %v747
      %v884 = vpack.c.b16 %v752, %v748
      %v885 = vpack.c.b16 %v757, %v753
      %v886 = vpack.c.b16 %v758, %v754
      %v887 = vpack.c.b16 %v759, %v755
      %v888 = vpack.c.b16 %v760, %v756
      %v1081 = vunpack.c.l.b16 %v306
      %v1082 = vunpack.c.l.b16 %v307
      %v1083 = vunpack.c.l.b16 %v308
      %v1084 = vunpack.c.l.b16 %v309
      %v1085 = vunpack.c.l.b16 %v310
      %v1086 = vunpack.c.l.b16 %v311
      %v1087 = vunpack.c.l.b16 %v312
      %v1088 = vunpack.c.l.b16 %v313
      %v1089 = vunpack.c.l.b16 %v314
      %v1090 = vunpack.c.l.b16 %v315
      %v1091 = vunpack.c.l.b16 %v316
      %v1092 = vunpack.c.l.b16 %v317
      %v1093 = vunpack.c.l.b16 %v318
      %v1094 = vunpack.c.l.b16 %v319
      %v1095 = vunpack.c.l.b16 %v320
      %v1096 = vunpack.c.l.b16 %v321
      %v1097 = vunpack.c.l.b16 %v322
      %v1098 = vunpack.c.l.b16 %v323
      %v1099 = vunpack.c.l.b16 %v324
      %v1100 = vunpack.c.l.b16 %v325
      %v1101 = vunpack.c.l.b16 %v326
      %v1102 = vunpack.c.l.b16 %v327
      %v1103 = vunpack.c.l.b16 %v328
      %v1104 = vunpack.c.l.b16 %v329
      %v1105 = vunpack.c.l.b16 %v330
      %v1106 = vunpack.c.l.b16 %v331
      %v1107 = vunpack.c.l.b16 %v332
      %v1108 = vunpack.c.l.b16 %v333
      %v1109 = vunpack.c.l.b16 %v334
      %v1110 = vunpack.c.l.b16 %v335
      %v1111 = vunpack.c.l.b16 %v336
      %v1112 = vunpack.c.l.b16 %v337
      %v1113 = vunpack.c.l.b16 %v338
      %v1114 = vunpack.c.l.b16 %v339
      %v1115 = vunpack.c.l.b16 %v340
      %v1116 = vunpack.c.l.b16 %v341
      %v1117 = vunpack.c.l.b16 %v342
      %v1118 = vunpack.c.l.b16 %v343
      %v1119 = vunpack.c.l.b16 %v344
      %v1120 = vunpack.c.l.b16 %v345
      %v1121 = vunpack.c.l.b16 %v346
      %v1122 = vunpack.c.l.b16 %v347
      %v1123 = vunpack.c.l.b16 %v348
      %v1124 = vunpack.c.l.b16 %v349
      %v1125 = vunpack.c.l.b16 %v350
      %v1126 = vunpack.c.l.b16 %v351
      %v1127 = vunpack.c.l.b16 %v352
      %v1128 = vunpack.c.l.b16 %v353
      %v1129 = vunpack.c.l.b16 %v354
      %v1130 = vunpack.c.l.b16 %v355
      %v1131 = vunpack.c.l.b16 %v356
      %v1132 = vunpack.c.l.b16 %v357
      %v1133 = vunpack.c.l.b16 %v358
      %v1134 = vunpack.c.l.b16 %v359
      %v1135 = vunpack.c.l.b16 %v360
      %v1136 = vunpack.c.l.b16 %v361
      %v1137 = vunpack.c.l.b16 %v362
      %v1138 = vunpack.c.l.b16 %v363
      %v1139 = vunpack.c.l.b16 %v364
      %v1140 = vunpack.c.l.b16 %v365
      %v1141 = vunpack.c.l.b16 %v366
      %v1142 = vunpack.c.l.b16 %v367
      %v1143 = vunpack.c.l.b16 %v368
      %v1144 = vunpack.c.l.b16 %v369
      %v1145 = vpack.c.b16 %v1082, %v1081
      %v1146 = vpack.c.b16 %v1084, %v1083
      %v1147 = vpack.c.b16 %v1086, %v1085
      %v1148 = vpack.c.b16 %v1088, %v1087
      %v1149 = vpack.c.b16 %v1090, %v1089
      %v1150 = vpack.c.b16 %v1092, %v1091
      %v1151 = vpack.c.b16 %v1094, %v1093
      %v1152 = vpack.c.b16 %v1096, %v1095
      %v1153 = vpack.c.b16 %v1098, %v1097
      %v1154 = vpack.c.b16 %v1100, %v1099
      %v1155 = vpack.c.b16 %v1102, %v1101
      %v1156 = vpack.c.b16 %v1104, %v1103
      %v1157 = vpack.c.b16 %v1106, %v1105
      %v1158 = vpack.c.b16 %v1108, %v1107
      %v1159 = vpack.c.b16 %v1110, %v1109
      %v1160 = vpack.c.b16 %v1112, %v1111
      %v1161 = vpack.c.b16 %v1114, %v1113
      %v1162 = vpack.c.b16 %v1116, %v1115
      %v1163 = vpack.c.b16 %v1118, %v1117
      %v1164 = vpack.c.b16 %v1120, %v1119
      %v1165 = vpack.c.b16 %v1122, %v1121
      %v1166 = vpack.c.b16 %v1124, %v1123
      %v1167 = vpack.c.b16 %v1126, %v1125
      %v1168 = vpack.c.b16 %v1128, %v1127
      %v1169 = vpack.c.b16 %v1130, %v1129
      %v1170 = vpack.c.b16 %v1132, %v1131
      %v1171 = vpack.c.b16 %v1134, %v1133
      %v1172 = vpack.c.b16 %v1136, %v1135
      %v1173 = vpack.c.b16 %v1138, %v1137
      %v1174 = vpack.c.b16 %v1140, %v1139
      %v1175 = vpack.c.b16 %v1142, %v1141
      %v1176 = vpack.c.b16 %v1144, %v1143
      %1209 = vmatprep.subr.bf16.mxu0 0
      %1210 = vmatpush1.bf16.msra.mxu0 %v1145
      %1211 = vmatprep.subr.bf16.mxu0 0
      %1212 = vmatpush1.bf16.msra.mxu0 %v1146
      %1213 = vmatprep.subr.bf16.mxu0 0
      %1214 = vmatpush1.bf16.msra.mxu0 %v1147
      %1215 = vmatprep.subr.bf16.mxu0 0
      %1216 = vmatpush1.bf16.msra.mxu0 %v1148
      %1217 = vmatprep.subr.bf16.mxu0 0
      %1218 = vmatpush1.bf16.msra.mxu0 %v1149
      %1219 = vmatprep.subr.bf16.mxu0 0
      %1220 = vmatpush1.bf16.msra.mxu0 %v1150
      %1221 = vmatprep.subr.bf16.mxu0 0
      %1222 = vmatpush1.bf16.msra.mxu0 %v1151
      %1223 = vmatprep.subr.bf16.mxu0 0
      %1224 = vmatpush1.bf16.msra.mxu0 %v1152
      %1225 = vmatprep.subr.bf16.mxu0 0
      %1226 = vmatpush1.bf16.msra.mxu0 %v1153
      %1227 = vmatprep.subr.bf16.mxu0 0
      %1228 = vmatpush1.bf16.msra.mxu0 %v1154
      %1229 = vmatprep.subr.bf16.mxu0 0
      %1230 = vmatpush1.bf16.msra.mxu0 %v1155
      %1231 = vmatprep.subr.bf16.mxu0 0
      %1232 = vmatpush1.bf16.msra.mxu0 %v1156
      %1233 = vmatprep.subr.bf16.mxu0 0
      %1234 = vmatpush1.bf16.msra.mxu0 %v1157
      %1235 = vmatprep.subr.bf16.mxu0 0
      %1236 = vmatpush1.bf16.msra.mxu0 %v1158
      %1237 = vmatprep.subr.bf16.mxu0 0
      %1238 = vmatpush1.bf16.msra.mxu0 %v1159
      %1239 = vmatprep.subr.bf16.mxu0 0
      %1240 = vmatpush1.bf16.msra.mxu0 %v1160
      %1241 = vmatprep.mubr.bf16.mxu0 %v762
      %1242 = vmatmul.mubr.bf16.gmra.mrb[0].mxu0 %v761
      %v1243 = vpop.f32.mrb[0].mxu0
      %v1244 = vadd.f32 %v375, %v1243
      %v1245 = vpop.f32.mrb[0].mxu0
      %v1246 = vpop.f32.mrb[0].mxu0
      %v1247 = vadd.f32 %v375, %v1246
      %v1248 = vpop.f32.mrb[0].mxu0
      %1249 = vmatprep.mubr.bf16.mxu0 %v766
      %1250 = vmatmul.mubr.bf16.gmra.mrb[0].mxu0 %v765
      %v1251 = vpop.f32.mrb[0].mxu0
      %v1252 = vadd.f32 %v375, %v1251
      %v1253 = vpop.f32.mrb[0].mxu0
      %v1254 = vpop.f32.mrb[0].mxu0
      %v1255 = vadd.f32 %v375, %v1254
      %v1256 = vpop.f32.mrb[0].mxu0
      %1257 = vmatprep.mubr.bf16.mxu0 %v770
      %1258 = vmatmul.mubr.bf16.gmra.mrb[0].mxu0 %v769
      %v1259 = vpop.f32.mrb[0].mxu0
      %v1260 = vadd.f32 %v375, %v1259
      %v1261 = vpop.f32.mrb[0].mxu0
      %v1262 = vpop.f32.mrb[0].mxu0
      %v1263 = vadd.f32 %v375, %v1262
      %v1264 = vpop.f32.mrb[0].mxu0
      %1265 = vmatprep.mubr.bf16.mxu0 %v774
      %1266 = vmatmul.mubr.bf16.gmra.mrb[0].mxu0 %v773
      %v1267 = vpop.f32.mrb[0].mxu0
      %v1268 = vadd.f32 %v375, %v1267
      %v1269 = vpop.f32.mrb[0].mxu0
      %v1270 = vpop.f32.mrb[0].mxu0
      %v1271 = vadd.f32 %v375, %v1270
      %v1272 = vpop.f32.mrb[0].mxu0
      %1273 = vmatprep.mubr.bf16.mxu0 %v778
      %1274 = vmatmul.mubr.bf16.gmra.mrb[0].mxu0 %v777
      %v1275 = vpop.f32.mrb[0].mxu0
      %v1276 = vadd.f32 %v375, %v1275
      %v1277 = vpop.f32.mrb[0].mxu0
      %v1278 = vpop.f32.mrb[0].mxu0
      %v1279 = vadd.f32 %v375, %v1278
      %v1280 = vpop.f32.mrb[0].mxu0
      %1281 = vmatprep.mubr.bf16.mxu0 %v782
      %1282 = vmatmul.mubr.bf16.gmra.mrb[0].mxu0 %v781
      %v1283 = vpop.f32.mrb[0].mxu0
      %v1284 = vadd.f32 %v375, %v1283
      %v1285 = vpop.f32.mrb[0].mxu0
      %v1286 = vpop.f32.mrb[0].mxu0
      %v1287 = vadd.f32 %v375, %v1286
      %v1288 = vpop.f32.mrb[0].mxu0
      %1289 = vmatprep.mubr.bf16.mxu0 %v786
      %1290 = vmatmul.mubr.bf16.gmra.mrb[0].mxu0 %v785
      %v1291 = vpop.f32.mrb[0].mxu0
      %v1292 = vadd.f32 %v375, %v1291
      %v1293 = vpop.f32.mrb[0].mxu0
      %v1294 = vpop.f32.mrb[0].mxu0
      %v1295 = vadd.f32 %v375, %v1294
      %v1296 = vpop.f32.mrb[0].mxu0
      %1297 = vmatprep.mubr.bf16.mxu0 %v790
      %1298 = vmatmul.mubr.bf16.gmra.mrb[0].mxu0 %v789
      %v1299 = vpop.f32.mrb[0].mxu0
      %v1300 = vadd.f32 %v375, %v1299
      %v1301 = vpop.f32.mrb[0].mxu0
      %v1302 = vpop.f32.mrb[0].mxu0
      %v1303 = vadd.f32 %v375, %v1302
      %v1304 = vpop.f32.mrb[0].mxu0
      %1305 = vmatprep.mubr.bf16.mxu0 %v794
      %1306 = vmatmul.mubr.bf16.gmra.mrb[0].mxu0 %v793
      %v1307 = vpop.f32.mrb[0].mxu0
      %v1308 = vadd.f32 %v375, %v1307
      %v1309 = vpop.f32.mrb[0].mxu0
      %v1310 = vpop.f32.mrb[0].mxu0
      %v1311 = vadd.f32 %v375, %v1310
      %v1312 = vpop.f32.mrb[0].mxu0
      %1313 = vmatprep.mubr.bf16.mxu0 %v798
      %1314 = vmatmul.mubr.bf16.gmra.mrb[0].mxu0 %v797
      %v1315 = vpop.f32.mrb[0].mxu0
      %v1316 = vadd.f32 %v375, %v1315
      %v1317 = vpop.f32.mrb[0].mxu0
      %v1318 = vpop.f32.mrb[0].mxu0
      %v1319 = vadd.f32 %v375, %v1318
      %v1320 = vpop.f32.mrb[0].mxu0
      %1321 = vmatprep.mubr.bf16.mxu0 %v802
      %1322 = vmatmul.mubr.bf16.gmra.mrb[0].mxu0 %v801
      %v1323 = vpop.f32.mrb[0].mxu0
      %v1324 = vadd.f32 %v375, %v1323
      %v1325 = vpop.f32.mrb[0].mxu0
      %v1326 = vpop.f32.mrb[0].mxu0
      %v1327 = vadd.f32 %v375, %v1326
      %v1328 = vpop.f32.mrb[0].mxu0
      %1329 = vmatprep.mubr.bf16.mxu0 %v806
      %1330 = vmatmul.mubr.bf16.gmra.mrb[0].mxu0 %v805
      %v1331 = vpop.f32.mrb[0].mxu0
      %v1332 = vadd.f32 %v375, %v1331
      %v1333 = vpop.f32.mrb[0].mxu0
      %v1334 = vpop.f32.mrb[0].mxu0
      %v1335 = vadd.f32 %v375, %v1334
      %v1336 = vpop.f32.mrb[0].mxu0
      %1337 = vmatprep.mubr.bf16.mxu0 %v810
      %1338 = vmatmul.mubr.bf16.gmra.mrb[0].mxu0 %v809
      %v1339 = vpop.f32.mrb[0].mxu0
      %v1340 = vadd.f32 %v375, %v1339
      %v1341 = vpop.f32.mrb[0].mxu0
      %v1342 = vpop.f32.mrb[0].mxu0
      %v1343 = vadd.f32 %v375, %v1342
      %v1344 = vpop.f32.mrb[0].mxu0
      %1345 = vmatprep.mubr.bf16.mxu0 %v814
      %1346 = vmatmul.mubr.bf16.gmra.mrb[0].mxu0 %v813
      %v1347 = vpop.f32.mrb[0].mxu0
      %v1348 = vadd.f32 %v375, %v1347
      %v1349 = vpop.f32.mrb[0].mxu0
      %v1350 = vpop.f32.mrb[0].mxu0
      %v1351 = vadd.f32 %v375, %v1350
      %v1352 = vpop.f32.mrb[0].mxu0
      %1353 = vmatprep.mubr.bf16.mxu0 %v818
      %1354 = vmatmul.mubr.bf16.gmra.mrb[0].mxu0 %v817
      %v1355 = vpop.f32.mrb[0].mxu0
      %v1356 = vadd.f32 %v375, %v1355
      %v1357 = vpop.f32.mrb[0].mxu0
      %v1358 = vpop.f32.mrb[0].mxu0
      %v1359 = vadd.f32 %v375, %v1358
      %v1360 = vpop.f32.mrb[0].mxu0
      %1361 = vmatprep.mubr.bf16.mxu0 %v822
      %1362 = vmatmul.mubr.bf16.gmra.mrb[0].mxu0 %v821
      %v1363 = vpop.f32.mrb[0].mxu0
      %v1364 = vadd.f32 %v375, %v1363
      %v1365 = vpop.f32.mrb[0].mxu0
      %v1366 = vpop.f32.mrb[0].mxu0
      %v1367 = vadd.f32 %v375, %v1366
      %v1368 = vpop.f32.mrb[0].mxu0
      %1369 = vmatprep.mubr.bf16.mxu0 %v826
      %1370 = vmatmul.mubr.bf16.gmra.mrb[0].mxu0 %v825
      %v1371 = vpop.f32.mrb[0].mxu0
      %v1372 = vadd.f32 %v375, %v1371
      %v1373 = vpop.f32.mrb[0].mxu0
      %v1374 = vpop.f32.mrb[0].mxu0
      %v1375 = vadd.f32 %v375, %v1374
      %v1376 = vpop.f32.mrb[0].mxu0
      %1377 = vmatprep.mubr.bf16.mxu0 %v830
      %1378 = vmatmul.mubr.bf16.gmra.mrb[0].mxu0 %v829
      %v1379 = vpop.f32.mrb[0].mxu0
      %v1380 = vadd.f32 %v375, %v1379
      %v1381 = vpop.f32.mrb[0].mxu0
      %v1382 = vpop.f32.mrb[0].mxu0
      %v1383 = vadd.f32 %v375, %v1382
      %v1384 = vpop.f32.mrb[0].mxu0
      %1385 = vmatprep.mubr.bf16.mxu0 %v834
      %1386 = vmatmul.mubr.bf16.gmra.mrb[0].mxu0 %v833
      %v1387 = vpop.f32.mrb[0].mxu0
      %v1388 = vadd.f32 %v375, %v1387
      %v1389 = vpop.f32.mrb[0].mxu0
      %v1390 = vpop.f32.mrb[0].mxu0
      %v1391 = vadd.f32 %v375, %v1390
      %v1392 = vpop.f32.mrb[0].mxu0
      %1393 = vmatprep.mubr.bf16.mxu0 %v838
      %1394 = vmatmul.mubr.bf16.gmra.mrb[0].mxu0 %v837
      %v1395 = vpop.f32.mrb[0].mxu0
      %v1396 = vadd.f32 %v375, %v1395
      %v1397 = vpop.f32.mrb[0].mxu0
      %v1398 = vpop.f32.mrb[0].mxu0
      %v1399 = vadd.f32 %v375, %v1398
      %v1400 = vpop.f32.mrb[0].mxu0
      %1401 = vmatprep.mubr.bf16.mxu0 %v842
      %1402 = vmatmul.mubr.bf16.gmra.mrb[0].mxu0 %v841
      %v1403 = vpop.f32.mrb[0].mxu0
      %v1404 = vadd.f32 %v375, %v1403
      %v1405 = vpop.f32.mrb[0].mxu0
      %v1406 = vpop.f32.mrb[0].mxu0
      %v1407 = vadd.f32 %v375, %v1406
      %v1408 = vpop.f32.mrb[0].mxu0
      %1409 = vmatprep.mubr.bf16.mxu0 %v846
      %1410 = vmatmul.mubr.bf16.gmra.mrb[0].mxu0 %v845
      %v1411 = vpop.f32.mrb[0].mxu0
      %v1412 = vadd.f32 %v375, %v1411
      %v1413 = vpop.f32.mrb[0].mxu0
      %v1414 = vpop.f32.mrb[0].mxu0
      %v1415 = vadd.f32 %v375, %v1414
      %v1416 = vpop.f32.mrb[0].mxu0
      %1417 = vmatprep.mubr.bf16.mxu0 %v850
      %1418 = vmatmul.mubr.bf16.gmra.mrb[0].mxu0 %v849
      %v1419 = vpop.f32.mrb[0].mxu0
      %v1420 = vadd.f32 %v375, %v1419
      %v1421 = vpop.f32.mrb[0].mxu0
      %v1422 = vpop.f32.mrb[0].mxu0
      %v1423 = vadd.f32 %v375, %v1422
      %v1424 = vpop.f32.mrb[0].mxu0
      %1425 = vmatprep.mubr.bf16.mxu0 %v854
      %1426 = vmatmul.mubr.bf16.gmra.mrb[0].mxu0 %v853
      %v1427 = vpop.f32.mrb[0].mxu0
      %v1428 = vadd.f32 %v375, %v1427
      %v1429 = vpop.f32.mrb[0].mxu0
      %v1430 = vpop.f32.mrb[0].mxu0
      %v1431 = vadd.f32 %v375, %v1430
      %v1432 = vpop.f32.mrb[0].mxu0
      %1433 = vmatprep.mubr.bf16.mxu0 %v858
      %1434 = vmatmul.mubr.bf16.gmra.mrb[0].mxu0 %v857
      %v1435 = vpop.f32.mrb[0].mxu0
      %v1436 = vadd.f32 %v375, %v1435
      %v1437 = vpop.f32.mrb[0].mxu0
      %v1438 = vpop.f32.mrb[0].mxu0
      %v1439 = vadd.f32 %v375, %v1438
      %v1440 = vpop.f32.mrb[0].mxu0
      %1441 = vmatprep.mubr.bf16.mxu0 %v862
      %1442 = vmatmul.mubr.bf16.gmra.mrb[0].mxu0 %v861
      %v1443 = vpop.f32.mrb[0].mxu0
      %v1444 = vadd.f32 %v375, %v1443
      %v1445 = vpop.f32.mrb[0].mxu0
      %v1446 = vpop.f32.mrb[0].mxu0
      %v1447 = vadd.f32 %v375, %v1446
      %v1448 = vpop.f32.mrb[0].mxu0
      %1449 = vmatprep.mubr.bf16.mxu0 %v866
      %1450 = vmatmul.mubr.bf16.gmra.mrb[0].mxu0 %v865
      %v1451 = vpop.f32.mrb[0].mxu0
      %v1452 = vadd.f32 %v375, %v1451
      %v1453 = vpop.f32.mrb[0].mxu0
      %v1454 = vpop.f32.mrb[0].mxu0
      %v1455 = vadd.f32 %v375, %v1454
      %v1456 = vpop.f32.mrb[0].mxu0
      %1457 = vmatprep.mubr.bf16.mxu0 %v870
      %1458 = vmatmul.mubr.bf16.gmra.mrb[0].mxu0 %v869
      %v1459 = vpop.f32.mrb[0].mxu0
      %v1460 = vadd.f32 %v375, %v1459
      %v1461 = vpop.f32.mrb[0].mxu0
      %v1462 = vpop.f32.mrb[0].mxu0
      %v1463 = vadd.f32 %v375, %v1462
      %v1464 = vpop.f32.mrb[0].mxu0
      %1465 = vmatprep.mubr.bf16.mxu0 %v874
      %1466 = vmatmul.mubr.bf16.gmra.mrb[0].mxu0 %v873
      %v1467 = vpop.f32.mrb[0].mxu0
      %v1468 = vadd.f32 %v375, %v1467
      %v1469 = vpop.f32.mrb[0].mxu0
      %v1470 = vpop.f32.mrb[0].mxu0
      %v1471 = vadd.f32 %v375, %v1470
      %v1472 = vpop.f32.mrb[0].mxu0
      %1473 = vmatprep.mubr.bf16.mxu0 %v878
      %1474 = vmatmul.mubr.bf16.gmra.mrb[0].mxu0 %v877
      %v1475 = vpop.f32.mrb[0].mxu0
      %v1476 = vadd.f32 %v375, %v1475
      %v1477 = vpop.f32.mrb[0].mxu0
      %v1478 = vpop.f32.mrb[0].mxu0
      %v1479 = vadd.f32 %v375, %v1478
      %v1480 = vpop.f32.mrb[0].mxu0
      %1481 = vmatprep.mubr.bf16.mxu0 %v882
      %1482 = vmatmul.mubr.bf16.gmra.mrb[0].mxu0 %v881
      %v1483 = vpop.f32.mrb[0].mxu0
      %v1484 = vadd.f32 %v375, %v1483
      %v1485 = vpop.f32.mrb[0].mxu0
      %v1486 = vpop.f32.mrb[0].mxu0
      %v1487 = vadd.f32 %v375, %v1486
      %v1488 = vpop.f32.mrb[0].mxu0
      %1489 = vmatprep.mubr.bf16.mxu0 %v886
      %1490 = vmatmul.mubr.bf16.gmra.mrb[0].mxu0 %v885
      %v1491 = vpop.f32.mrb[0].mxu0
      %v1492 = vadd.f32 %v375, %v1491
      %v1493 = vpop.f32.mrb[0].mxu0
      %v1494 = vpop.f32.mrb[0].mxu0
      %v1495 = vadd.f32 %v375, %v1494
      %v1496 = vpop.f32.mrb[0].mxu0
      %1497 = vdwg.mxu0
      %1498 = vmatprep.subr.bf16.mxu0 0
      %1499 = vmatpush1.bf16.msra.mxu0 %v1161
      %1500 = vmatprep.subr.bf16.mxu0 0
      %1501 = vmatpush1.bf16.msra.mxu0 %v1162
      %1502 = vmatprep.subr.bf16.mxu0 0
      %1503 = vmatpush1.bf16.msra.mxu0 %v1163
      %1504 = vmatprep.subr.bf16.mxu0 0
      %1505 = vmatpush1.bf16.msra.mxu0 %v1164
      %1506 = vmatprep.subr.bf16.mxu0 0
      %1507 = vmatpush1.bf16.msra.mxu0 %v1165
      %1508 = vmatprep.subr.bf16.mxu0 0
      %1509 = vmatpush1.bf16.msra.mxu0 %v1166
      %1510 = vmatprep.subr.bf16.mxu0 0
      %1511 = vmatpush1.bf16.msra.mxu0 %v1167
      %1512 = vmatprep.subr.bf16.mxu0 0
      %1513 = vmatpush1.bf16.msra.mxu0 %v1168
      %1514 = vmatprep.subr.bf16.mxu0 0
      %1515 = vmatpush1.bf16.msra.mxu0 %v1169
      %1516 = vmatprep.subr.bf16.mxu0 0
      %1517 = vmatpush1.bf16.msra.mxu0 %v1170
      %1518 = vmatprep.subr.bf16.mxu0 0
      %1519 = vmatpush1.bf16.msra.mxu0 %v1171
      %1520 = vmatprep.subr.bf16.mxu0 0
      %1521 = vmatpush1.bf16.msra.mxu0 %v1172
      %1522 = vmatprep.subr.bf16.mxu0 0
      %1523 = vmatpush1.bf16.msra.mxu0 %v1173
      %1524 = vmatprep.subr.bf16.mxu0 0
      %1525 = vmatpush1.bf16.msra.mxu0 %v1174
      %1526 = vmatprep.subr.bf16.mxu0 0
      %1527 = vmatpush1.bf16.msra.mxu0 %v1175
      %1528 = vmatprep.subr.bf16.mxu0 0
      %1529 = vmatpush1.bf16.msra.mxu0 %v1176
      %1530 = vmatprep.mubr.bf16.mxu0 %v764
      %1531 = vmatmul.mubr.bf16.gmra.mrb[0].mxu0 %v763
      %v1532 = vpop.f32.mrb[0].mxu0
      %v1533 = vadd.f32 %v1244, %v1532
      %v1534 = vpop.f32.mrb[0].mxu0
      %v1535 = vpop.f32.mrb[0].mxu0
      %v1536 = vadd.f32 %v1247, %v1535
      %v1537 = vpop.f32.mrb[0].mxu0
      %1538 = vmatprep.mubr.bf16.mxu0 %v768
      %1539 = vmatmul.mubr.bf16.gmra.mrb[0].mxu0 %v767
      %v1540 = vpop.f32.mrb[0].mxu0
      %v1541 = vadd.f32 %v1252, %v1540
      %v1542 = vpop.f32.mrb[0].mxu0
      %v1543 = vpop.f32.mrb[0].mxu0
      %v1544 = vadd.f32 %v1255, %v1543
      %v1545 = vpop.f32.mrb[0].mxu0
      %1546 = vmatprep.mubr.bf16.mxu0 %v772
      %1547 = vmatmul.mubr.bf16.gmra.mrb[0].mxu0 %v771
      %v1548 = vpop.f32.mrb[0].mxu0
      %v1549 = vadd.f32 %v1260, %v1548
      %v1550 = vpop.f32.mrb[0].mxu0
      %v1551 = vpop.f32.mrb[0].mxu0
      %v1552 = vadd.f32 %v1263, %v1551
      %v1553 = vpop.f32.mrb[0].mxu0
      %1554 = vmatprep.mubr.bf16.mxu0 %v776
      %1555 = vmatmul.mubr.bf16.gmra.mrb[0].mxu0 %v775
      %v1556 = vpop.f32.mrb[0].mxu0
      %v1557 = vadd.f32 %v1268, %v1556
      %v1558 = vpop.f32.mrb[0].mxu0
      %v1559 = vpop.f32.mrb[0].mxu0
      %v1560 = vadd.f32 %v1271, %v1559
      %v1561 = vpop.f32.mrb[0].mxu0
      %1562 = vmatprep.mubr.bf16.mxu0 %v780
      %1563 = vmatmul.mubr.bf16.gmra.mrb[0].mxu0 %v779
      %v1564 = vpop.f32.mrb[0].mxu0
      %v1565 = vadd.f32 %v1276, %v1564
      %v1566 = vpop.f32.mrb[0].mxu0
      %v1567 = vpop.f32.mrb[0].mxu0
      %v1568 = vadd.f32 %v1279, %v1567
      %v1569 = vpop.f32.mrb[0].mxu0
      %1570 = vmatprep.mubr.bf16.mxu0 %v784
      %1571 = vmatmul.mubr.bf16.gmra.mrb[0].mxu0 %v783
      %v1572 = vpop.f32.mrb[0].mxu0
      %v1573 = vadd.f32 %v1284, %v1572
      %v1574 = vpop.f32.mrb[0].mxu0
      %v1575 = vpop.f32.mrb[0].mxu0
      %v1576 = vadd.f32 %v1287, %v1575
      %v1577 = vpop.f32.mrb[0].mxu0
      %1578 = vmatprep.mubr.bf16.mxu0 %v788
      %1579 = vmatmul.mubr.bf16.gmra.mrb[0].mxu0 %v787
      %v1580 = vpop.f32.mrb[0].mxu0
      %v1581 = vadd.f32 %v1292, %v1580
      %v1582 = vpop.f32.mrb[0].mxu0
      %v1583 = vpop.f32.mrb[0].mxu0
      %v1584 = vadd.f32 %v1295, %v1583
      %v1585 = vpop.f32.mrb[0].mxu0
      %1586 = vmatprep.mubr.bf16.mxu0 %v792
      %1587 = vmatmul.mubr.bf16.gmra.mrb[0].mxu0 %v791
      %v1588 = vpop.f32.mrb[0].mxu0
      %v1589 = vadd.f32 %v1300, %v1588
      %v1590 = vpop.f32.mrb[0].mxu0
      %v1591 = vpop.f32.mrb[0].mxu0
      %v1592 = vadd.f32 %v1303, %v1591
      %v1593 = vpop.f32.mrb[0].mxu0
      %1594 = vmatprep.mubr.bf16.mxu0 %v796
      %1595 = vmatmul.mubr.bf16.gmra.mrb[0].mxu0 %v795
      %v1596 = vpop.f32.mrb[0].mxu0
      %v1597 = vadd.f32 %v1308, %v1596
      %v1598 = vpop.f32.mrb[0].mxu0
      %v1599 = vpop.f32.mrb[0].mxu0
      %v1600 = vadd.f32 %v1311, %v1599
      %v1601 = vpop.f32.mrb[0].mxu0
      %1602 = vmatprep.mubr.bf16.mxu0 %v800
      %1603 = vmatmul.mubr.bf16.gmra.mrb[0].mxu0 %v799
      %v1604 = vpop.f32.mrb[0].mxu0
      %v1605 = vadd.f32 %v1316, %v1604
      %v1606 = vpop.f32.mrb[0].mxu0
      %v1607 = vpop.f32.mrb[0].mxu0
      %v1608 = vadd.f32 %v1319, %v1607
      %v1609 = vpop.f32.mrb[0].mxu0
      %1610 = vmatprep.mubr.bf16.mxu0 %v804
      %1611 = vmatmul.mubr.bf16.gmra.mrb[0].mxu0 %v803
      %v1612 = vpop.f32.mrb[0].mxu0
      %v1613 = vadd.f32 %v1324, %v1612
      %v1614 = vpop.f32.mrb[0].mxu0
      %v1615 = vpop.f32.mrb[0].mxu0
      %v1616 = vadd.f32 %v1327, %v1615
      %v1617 = vpop.f32.mrb[0].mxu0
      %1618 = vmatprep.mubr.bf16.mxu0 %v808
      %1619 = vmatmul.mubr.bf16.gmra.mrb[0].mxu0 %v807
      %v1620 = vpop.f32.mrb[0].mxu0
      %v1621 = vadd.f32 %v1332, %v1620
      %v1622 = vpop.f32.mrb[0].mxu0
      %v1623 = vpop.f32.mrb[0].mxu0
      %v1624 = vadd.f32 %v1335, %v1623
      %v1625 = vpop.f32.mrb[0].mxu0
      %1626 = vmatprep.mubr.bf16.mxu0 %v812
      %1627 = vmatmul.mubr.bf16.gmra.mrb[0].mxu0 %v811
      %v1628 = vpop.f32.mrb[0].mxu0
      %v1629 = vadd.f32 %v1340, %v1628
      %v1630 = vpop.f32.mrb[0].mxu0
      %v1631 = vpop.f32.mrb[0].mxu0
      %v1632 = vadd.f32 %v1343, %v1631
      %v1633 = vpop.f32.mrb[0].mxu0
      %1634 = vmatprep.mubr.bf16.mxu0 %v816
      %1635 = vmatmul.mubr.bf16.gmra.mrb[0].mxu0 %v815
      %v1636 = vpop.f32.mrb[0].mxu0
      %v1637 = vadd.f32 %v1348, %v1636
      %v1638 = vpop.f32.mrb[0].mxu0
      %v1639 = vpop.f32.mrb[0].mxu0
      %v1640 = vadd.f32 %v1351, %v1639
      %v1641 = vpop.f32.mrb[0].mxu0
      %1642 = vmatprep.mubr.bf16.mxu0 %v820
      %1643 = vmatmul.mubr.bf16.gmra.mrb[0].mxu0 %v819
      %v1644 = vpop.f32.mrb[0].mxu0
      %v1645 = vadd.f32 %v1356, %v1644
      %v1646 = vpop.f32.mrb[0].mxu0
      %v1647 = vpop.f32.mrb[0].mxu0
      %v1648 = vadd.f32 %v1359, %v1647
      %v1649 = vpop.f32.mrb[0].mxu0
      %1650 = vmatprep.mubr.bf16.mxu0 %v824
      %1651 = vmatmul.mubr.bf16.gmra.mrb[0].mxu0 %v823
      %v1652 = vpop.f32.mrb[0].mxu0
      %v1653 = vadd.f32 %v1364, %v1652
      %v1654 = vpop.f32.mrb[0].mxu0
      %v1655 = vpop.f32.mrb[0].mxu0
      %v1656 = vadd.f32 %v1367, %v1655
      %v1657 = vpop.f32.mrb[0].mxu0
      %1658 = vmatprep.mubr.bf16.mxu0 %v828
      %1659 = vmatmul.mubr.bf16.gmra.mrb[0].mxu0 %v827
      %v1660 = vpop.f32.mrb[0].mxu0
      %v1661 = vadd.f32 %v1372, %v1660
      %v1662 = vpop.f32.mrb[0].mxu0
      %v1663 = vpop.f32.mrb[0].mxu0
      %v1664 = vadd.f32 %v1375, %v1663
      %v1665 = vpop.f32.mrb[0].mxu0
      %1666 = vmatprep.mubr.bf16.mxu0 %v832
      %1667 = vmatmul.mubr.bf16.gmra.mrb[0].mxu0 %v831
      %v1668 = vpop.f32.mrb[0].mxu0
      %v1669 = vadd.f32 %v1380, %v1668
      %v1670 = vpop.f32.mrb[0].mxu0
      %v1671 = vpop.f32.mrb[0].mxu0
      %v1672 = vadd.f32 %v1383, %v1671
      %v1673 = vpop.f32.mrb[0].mxu0
      %1674 = vmatprep.mubr.bf16.mxu0 %v836
      %1675 = vmatmul.mubr.bf16.gmra.mrb[0].mxu0 %v835
      %v1676 = vpop.f32.mrb[0].mxu0
      %v1677 = vadd.f32 %v1388, %v1676
      %v1678 = vpop.f32.mrb[0].mxu0
      %v1679 = vpop.f32.mrb[0].mxu0
      %v1680 = vadd.f32 %v1391, %v1679
      %v1681 = vpop.f32.mrb[0].mxu0
      %1682 = vmatprep.mubr.bf16.mxu0 %v840
      %1683 = vmatmul.mubr.bf16.gmra.mrb[0].mxu0 %v839
      %v1684 = vpop.f32.mrb[0].mxu0
      %v1685 = vadd.f32 %v1396, %v1684
      %v1686 = vpop.f32.mrb[0].mxu0
      %v1687 = vpop.f32.mrb[0].mxu0
      %v1688 = vadd.f32 %v1399, %v1687
      %v1689 = vpop.f32.mrb[0].mxu0
      %1690 = vmatprep.mubr.bf16.mxu0 %v844
      %1691 = vmatmul.mubr.bf16.gmra.mrb[0].mxu0 %v843
      %v1692 = vpop.f32.mrb[0].mxu0
      %v1693 = vadd.f32 %v1404, %v1692
      %v1694 = vpop.f32.mrb[0].mxu0
      %v1695 = vpop.f32.mrb[0].mxu0
      %v1696 = vadd.f32 %v1407, %v1695
      %v1697 = vpop.f32.mrb[0].mxu0
      %1698 = vmatprep.mubr.bf16.mxu0 %v848
      %1699 = vmatmul.mubr.bf16.gmra.mrb[0].mxu0 %v847
      %v1700 = vpop.f32.mrb[0].mxu0
      %v1701 = vadd.f32 %v1412, %v1700
      %v1702 = vpop.f32.mrb[0].mxu0
      %v1703 = vpop.f32.mrb[0].mxu0
      %v1704 = vadd.f32 %v1415, %v1703
      %v1705 = vpop.f32.mrb[0].mxu0
      %1706 = vmatprep.mubr.bf16.mxu0 %v852
      %1707 = vmatmul.mubr.bf16.gmra.mrb[0].mxu0 %v851
      %v1708 = vpop.f32.mrb[0].mxu0
      %v1709 = vadd.f32 %v1420, %v1708
      %v1710 = vpop.f32.mrb[0].mxu0
      %v1711 = vpop.f32.mrb[0].mxu0
      %v1712 = vadd.f32 %v1423, %v1711
      %v1713 = vpop.f32.mrb[0].mxu0
      %1714 = vmatprep.mubr.bf16.mxu0 %v856
      %1715 = vmatmul.mubr.bf16.gmra.mrb[0].mxu0 %v855
      %v1716 = vpop.f32.mrb[0].mxu0
      %v1717 = vadd.f32 %v1428, %v1716
      %v1718 = vpop.f32.mrb[0].mxu0
      %v1719 = vpop.f32.mrb[0].mxu0
      %v1720 = vadd.f32 %v1431, %v1719
      %v1721 = vpop.f32.mrb[0].mxu0
      %1722 = vmatprep.mubr.bf16.mxu0 %v860
      %1723 = vmatmul.mubr.bf16.gmra.mrb[0].mxu0 %v859
      %v1724 = vpop.f32.mrb[0].mxu0
      %v1725 = vadd.f32 %v1436, %v1724
      %v1726 = vpop.f32.mrb[0].mxu0
      %v1727 = vpop.f32.mrb[0].mxu0
      %v1728 = vadd.f32 %v1439, %v1727
      %v1729 = vpop.f32.mrb[0].mxu0
      %1730 = vmatprep.mubr.bf16.mxu0 %v864
      %1731 = vmatmul.mubr.bf16.gmra.mrb[0].mxu0 %v863
      %v1732 = vpop.f32.mrb[0].mxu0
      %v1733 = vadd.f32 %v1444, %v1732
      %v1734 = vpop.f32.mrb[0].mxu0
      %v1735 = vpop.f32.mrb[0].mxu0
      %v1736 = vadd.f32 %v1447, %v1735
      %v1737 = vpop.f32.mrb[0].mxu0
      %1738 = vmatprep.mubr.bf16.mxu0 %v868
      %1739 = vmatmul.mubr.bf16.gmra.mrb[0].mxu0 %v867
      %v1740 = vpop.f32.mrb[0].mxu0
      %v1741 = vadd.f32 %v1452, %v1740
      %v1742 = vpop.f32.mrb[0].mxu0
      %v1743 = vpop.f32.mrb[0].mxu0
      %v1744 = vadd.f32 %v1455, %v1743
      %v1745 = vpop.f32.mrb[0].mxu0
      %1746 = vmatprep.mubr.bf16.mxu0 %v872
      %1747 = vmatmul.mubr.bf16.gmra.mrb[0].mxu0 %v871
      %v1748 = vpop.f32.mrb[0].mxu0
      %v1749 = vadd.f32 %v1460, %v1748
      %v1750 = vpop.f32.mrb[0].mxu0
      %v1751 = vpop.f32.mrb[0].mxu0
      %v1752 = vadd.f32 %v1463, %v1751
      %v1753 = vpop.f32.mrb[0].mxu0
      %1754 = vmatprep.mubr.bf16.mxu0 %v876
      %1755 = vmatmul.mubr.bf16.gmra.mrb[0].mxu0 %v875
      %v1756 = vpop.f32.mrb[0].mxu0
      %v1757 = vadd.f32 %v1468, %v1756
      %v1758 = vpop.f32.mrb[0].mxu0
      %v1759 = vpop.f32.mrb[0].mxu0
      %v1760 = vadd.f32 %v1471, %v1759
      %v1761 = vpop.f32.mrb[0].mxu0
      %1762 = vmatprep.mubr.bf16.mxu0 %v880
      %1763 = vmatmul.mubr.bf16.gmra.mrb[0].mxu0 %v879
      %v1764 = vpop.f32.mrb[0].mxu0
      %v1765 = vadd.f32 %v1476, %v1764
      %v1766 = vpop.f32.mrb[0].mxu0
      %v1767 = vpop.f32.mrb[0].mxu0
      %v1768 = vadd.f32 %v1479, %v1767
      %v1769 = vpop.f32.mrb[0].mxu0
      %1770 = vmatprep.mubr.bf16.mxu0 %v884
      %1771 = vmatmul.mubr.bf16.gmra.mrb[0].mxu0 %v883
      %v1772 = vpop.f32.mrb[0].mxu0
      %v1773 = vadd.f32 %v1484, %v1772
      %v1774 = vpop.f32.mrb[0].mxu0
      %v1775 = vpop.f32.mrb[0].mxu0
      %v1776 = vadd.f32 %v1487, %v1775
      %v1777 = vpop.f32.mrb[0].mxu0
      %1778 = vmatprep.mubr.bf16.mxu0 %v888
      %1779 = vmatmul.mubr.bf16.gmra.mrb[0].mxu0 %v887
      %v1780 = vpop.f32.mrb[0].mxu0
      %v1781 = vadd.f32 %v1492, %v1780
      %v1782 = vpop.f32.mrb[0].mxu0
      %v1783 = vpop.f32.mrb[0].mxu0
      %v1784 = vadd.f32 %v1495, %v1783
      %v1785 = vpop.f32.mrb[0].mxu0
      %1786 = vdwg.mxu0
      %v1787 = vmax.f32 %v1533, 0.0
      %v1788 = vmax.f32 %v1536, 0.0
      %v1789 = vmax.f32 %v1541, 0.0
      %v1790 = vmax.f32 %v1544, 0.0
      %v1791 = vmax.f32 %v1549, 0.0
      %v1792 = vmax.f32 %v1552, 0.0
      %v1793 = vmax.f32 %v1557, 0.0
      %v1794 = vmax.f32 %v1560, 0.0
      %v1795 = vmax.f32 %v1565, 0.0
      %v1796 = vmax.f32 %v1568, 0.0
      %v1797 = vmax.f32 %v1573, 0.0
      %v1798 = vmax.f32 %v1576, 0.0
      %v1799 = vmax.f32 %v1581, 0.0
      %v1800 = vmax.f32 %v1584, 0.0
      %v1801 = vmax.f32 %v1589, 0.0
      %v1802 = vmax.f32 %v1592, 0.0
      %v1803 = vmax.f32 %v1597, 0.0
      %v1804 = vmax.f32 %v1600, 0.0
      %v1805 = vmax.f32 %v1605, 0.0
      %v1806 = vmax.f32 %v1608, 0.0
      %v1807 = vmax.f32 %v1613, 0.0
      %v1808 = vmax.f32 %v1616, 0.0
      %v1809 = vmax.f32 %v1621, 0.0
      %v1810 = vmax.f32 %v1624, 0.0
      %v1811 = vmax.f32 %v1629, 0.0
      %v1812 = vmax.f32 %v1632, 0.0
      %v1813 = vmax.f32 %v1637, 0.0
      %v1814 = vmax.f32 %v1640, 0.0
      %v1815 = vmax.f32 %v1645, 0.0
      %v1816 = vmax.f32 %v1648, 0.0
      %v1817 = vmax.f32 %v1653, 0.0
      %v1818 = vmax.f32 %v1656, 0.0
      %v1819 = vmax.f32 %v1661, 0.0
      %v1820 = vmax.f32 %v1664, 0.0
      %v1821 = vmax.f32 %v1669, 0.0
      %v1822 = vmax.f32 %v1672, 0.0
      %v1823 = vmax.f32 %v1677, 0.0
      %v1824 = vmax.f32 %v1680, 0.0
      %v1825 = vmax.f32 %v1685, 0.0
      %v1826 = vmax.f32 %v1688, 0.0
      %v1827 = vmax.f32 %v1693, 0.0
      %v1828 = vmax.f32 %v1696, 0.0
      %v1829 = vmax.f32 %v1701, 0.0
      %v1830 = vmax.f32 %v1704, 0.0
      %v1831 = vmax.f32 %v1709, 0.0
      %v1832 = vmax.f32 %v1712, 0.0
      %v1833 = vmax.f32 %v1717, 0.0
      %v1834 = vmax.f32 %v1720, 0.0
      %v1835 = vmax.f32 %v1725, 0.0
      %v1836 = vmax.f32 %v1728, 0.0
      %v1837 = vmax.f32 %v1733, 0.0
      %v1838 = vmax.f32 %v1736, 0.0
      %v1839 = vmax.f32 %v1741, 0.0
      %v1840 = vmax.f32 %v1744, 0.0
      %v1841 = vmax.f32 %v1749, 0.0
      %v1842 = vmax.f32 %v1752, 0.0
      %v1843 = vmax.f32 %v1757, 0.0
      %v1844 = vmax.f32 %v1760, 0.0
      %v1845 = vmax.f32 %v1765, 0.0
      %v1846 = vmax.f32 %v1768, 0.0
      %v1847 = vmax.f32 %v1773, 0.0
      %v1848 = vmax.f32 %v1776, 0.0
      %v1849 = vmax.f32 %v1781, 0.0
      %v1850 = vmax.f32 %v1784, 0.0
      %1851 = vst [vmem:[%s175] sm:$0xff] %v1787
      %1852 = vst [vmem:[%s175 + $0x8] sm:$0xff] %v1788
      %1853 = vst [vmem:[%s175 + $0x10] sm:$0xff] %v1789
      %1854 = vst [vmem:[%s175 + $0x18] sm:$0xff] %v1790
      %1855 = vst [vmem:[%s175 + $0x20] sm:$0xff] %v1791
      %1856 = vst [vmem:[%s175 + $0x28] sm:$0xff] %v1792
      %1857 = vst [vmem:[%s175 + $0x30] sm:$0xff] %v1793
      %1858 = vst [vmem:[%s175 + $0x38] sm:$0xff] %v1794
      %1859 = vst [vmem:[%s175 + $0x40] sm:$0xff] %v1795
      %1860 = vst [vmem:[%s175 + $0x48] sm:$0xff] %v1796
      %1861 = vst [vmem:[%s175 + $0x50] sm:$0xff] %v1797
      %1862 = vst [vmem:[%s175 + $0x58] sm:$0xff] %v1798
      %1863 = vst [vmem:[%s175 + $0x60] sm:$0xff] %v1799
      %1864 = vst [vmem:[%s175 + $0x68] sm:$0xff] %v1800
      %1865 = vst [vmem:[%s175 + $0x70] sm:$0xff] %v1801
      %1866 = vst [vmem:[%s175 + $0x78] sm:$0xff] %v1802
      %1867 = vst [vmem:[%s175 + $0x80] sm:$0xff] %v1803
      %1868 = vst [vmem:[%s175 + $0x88] sm:$0xff] %v1804
      %1869 = vst [vmem:[%s175 + $0x90] sm:$0xff] %v1805
      %1870 = vst [vmem:[%s175 + $0x98] sm:$0xff] %v1806
      %1871 = vst [vmem:[%s175 + $0xa0] sm:$0xff] %v1807
      %1872 = vst [vmem:[%s175 + $0xa8] sm:$0xff] %v1808
      %1873 = vst [vmem:[%s175 + $0xb0] sm:$0xff] %v1809
      %1874 = vst [vmem:[%s175 + $0xb8] sm:$0xff] %v1810
      %1875 = vst [vmem:[%s175 + $0xc0] sm:$0xff] %v1811
      %1876 = vst [vmem:[%s175 + $0xc8] sm:$0xff] %v1812
      %1877 = vst [vmem:[%s175 + $0xd0] sm:$0xff] %v1813
      %1878 = vst [vmem:[%s175 + $0xd8] sm:$0xff] %v1814
      %1879 = vst [vmem:[%s175 + $0xe0] sm:$0xff] %v1815
      %1880 = vst [vmem:[%s175 + $0xe8] sm:$0xff] %v1816
      %1881 = vst [vmem:[%s175 + $0xf0] sm:$0xff] %v1817
      %1882 = vst [vmem:[%s175 + $0xf8] sm:$0xff] %v1818
      %1883 = vst [vmem:[%s175 + $0x100] sm:$0xff] %v1819
      %1884 = vst [vmem:[%s175 + $0x108] sm:$0xff] %v1820
      %1885 = vst [vmem:[%s175 + $0x110] sm:$0xff] %v1821
      %1886 = vst [vmem:[%s175 + $0x118] sm:$0xff] %v1822
      %1887 = vst [vmem:[%s175 + $0x120] sm:$0xff] %v1823
      %1888 = vst [vmem:[%s175 + $0x128] sm:$0xff] %v1824
      %1889 = vst [vmem:[%s175 + $0x130] sm:$0xff] %v1825
      %1890 = vst [vmem:[%s175 + $0x138] sm:$0xff] %v1826
      %1891 = vst [vmem:[%s175 + $0x140] sm:$0xff] %v1827
      %1892 = vst [vmem:[%s175 + $0x148] sm:$0xff] %v1828
      %1893 = vst [vmem:[%s175 + $0x150] sm:$0xff] %v1829
      %1894 = vst [vmem:[%s175 + $0x158] sm:$0xff] %v1830
      %1895 = vst [vmem:[%s175 + $0x160] sm:$0xff] %v1831
      %1896 = vst [vmem:[%s175 + $0x168] sm:$0xff] %v1832
      %1897 = vst [vmem:[%s175 + $0x170] sm:$0xff] %v1833
      %1898 = vst [vmem:[%s175 + $0x178] sm:$0xff] %v1834
      %1899 = vst [vmem:[%s175 + $0x180] sm:$0xff] %v1835
      %1900 = vst [vmem:[%s175 + $0x188] sm:$0xff] %v1836
      %1901 = vst [vmem:[%s175 + $0x190] sm:$0xff] %v1837
      %1902 = vst [vmem:[%s175 + $0x198] sm:$0xff] %v1838
      %1903 = vst [vmem:[%s175 + $0x1a0] sm:$0xff] %v1839
      %1904 = vst [vmem:[%s175 + $0x1a8] sm:$0xff] %v1840
      %1905 = vst [vmem:[%s175 + $0x1b0] sm:$0xff] %v1841
      %1906 = vst [vmem:[%s175 + $0x1b8] sm:$0xff] %v1842
      %1907 = vst [vmem:[%s175 + $0x1c0] sm:$0xff] %v1843
      %1908 = vst [vmem:[%s175 + $0x1c8] sm:$0xff] %v1844
      %1909 = vst [vmem:[%s175 + $0x1d0] sm:$0xff] %v1845
      %1910 = vst [vmem:[%s175 + $0x1d8] sm:$0xff] %v1846
      %1911 = vst [vmem:[%s175 + $0x1e0] sm:$0xff] %v1847
      %1912 = vst [vmem:[%s175 + $0x1e8] sm:$0xff] %v1848
      %1913 = vst [vmem:[%s175 + $0x1f0] sm:$0xff] %v1849
      %1914 = vst [vmem:[%s175 + $0x1f8] sm:$0xff] %v1850
      %s1915 = smul.u32 64, %s14
      %p1916 = scmp.lt.s32.totalorder %s1915, 255
      %s1917 = scalar_select %p1916, %s1915, 255
      %s1918 = smul.addr %s1917, 8
      %s1919 = scalar_lea.vmem %s3, %s1918
      // Predicated region
      $region33: #{video_model_stem_forward.2} parent=31 // pred_check
        %p1920 = pneg %p100
      $region34: #{video_model_stem_forward.2} parent=31 // pred_check_branch
        %1922 = sbr.rel (%p1920) target = $region36
      $region35: #{video_model_stem_forward.2} parent=31 // pred_region
        %s1923 = smul.u32 64, %s14
      $region36: #{video_model_stem_forward.2} parent=31 // pred_fallthru
        _
    $region32: #{video_model_stem_forward.2} parent=5 // pred_fallthru
      _
    %p1924 = scmp.le.s32.totalorder 2, %s9
    // Predicated region
    $region37: #{video_model_stem_forward.2} parent=5 // pred_check
      %p1925 = pneg %p1924
    $region38: #{video_model_stem_forward.2} parent=5 // pred_check_branch
      %1927 = sbr.rel (%p1925) target = $region40
    $region39: #{video_model_stem_forward.2} parent=5 // pred_region
      %s1928 = ssub.s32 %s9, 2
      // Predicated region
      $region41: #{video_model_stem_forward.2} parent=39 // pred_check
        %p1929 = pneg %p106
      $region42: #{video_model_stem_forward.2} parent=39 // pred_check_branch
        %1931 = sbr.rel (%p1929) target = $region44
      $region43: #{video_model_stem_forward.2} parent=39 // pred_region
        %s1932 = smul.u32 64, %s15
        %p1933 = scmp.lt.s32.totalorder %s1932, 255
        %s1934 = scalar_select %p1933, %s1932, 255
        %s1935 = smul.addr %s1934, 8
        %s1936 = scalar_lea.vmem %s3, %s1935
      $region44: #{video_model_stem_forward.2} parent=39 // pred_fallthru
        _
    $region40: #{video_model_stem_forward.2} parent=5 // pred_fallthru
      _
  $region6: #{video_model_stem_forward.2} parent=0 // loop_footer
    %s13 = sadd.s32 1, %s9
  $region7: #{video_model_stem_forward.2} parent=0 // loop_footer_branch
    %8 = sbr.rel target = $region3
  $region8: #{video_model_stem_forward.2} parent=0 // loop_exit
    _

// kernel: video_model_stem_forward.3
$region0: #{video_model_stem_forward.3}
  #allocation0 [shape = 'u32[]', space=smem, size = 0x4, offset = 0x4, fixed_abs, tag = 'smem constant byte address 0x4 - core index']
  #allocation1 [shape = 'u32[144,128]{1,0:T(1,128)}', space=vmem, size = 0x12000, scoped, tag = 'internal scratch']
  %s0 = inlined_call_operand.vmem [shape: f32[8,18,9,256], index: 0, kind: input, shape index: {}]
  %s1 = inlined_call_operand.vmem [shape: f32[8,8,8,128], index: 1, kind: output, shape index: {}]
  %s2 = sld [smem:[#allocation0]]
  $region37: #{video_model_stem_forward.3} parent=0
    _
  %s4 = ssub.s32 1, %s2
  %s5 = scalar_select 0, %s4, %s2
  loop: start=0, step=1, limit=10
  $region2: #{video_model_stem_forward.3} parent=0 // loop_pre_header
    _
  $region3: #{video_model_stem_forward.3} parent=0 // loop_header
    %s7 = sphi 0, %s11
    %p8 = scmp.ge.s32.totalorder %s7, 10
    %s17 = sphi 0, %s19
    %s20 = sphi 0, %s17
    %s21 = sphi 0, %s20
    %s37 = sphi 0, %s21
    %s43 = sphi 0, %s45
    %s46 = sphi 0, %s43
    %s47 = sphi 0, %s46
    %s63 = sphi 0, %s47
  $region4: #{video_model_stem_forward.3} parent=0 // loop_header_branch
    %10 = sbr.rel (%p8) target = $region8
  $region5: #{video_model_stem_forward.3} parent=0 // loop_body
    %s12 = ssub.s32 %s7, 1
    %s13 = ssub.s32 %s7, 2
    %s14 = sadd.s32 %s7, 1
    %s15 = ssub.s32 %s7, %s14
    %p16 = scmp.eq.s32.totalorder %s15, 0
    %s18 = sadd.s32 %s17, 1
    %s19 = scalar_select %p16, %s17, %s18
    %p22 = pneg %p16
    %p23 = scmp.eq.s32.totalorder %s7, 7
    %p24 = por %p22, %p23
    %p25 = scmp.ne.s32.totalorder %s17, %s20
    %p26 = scmp.eq.s32.totalorder %s7, 0
    %p27 = por %p25, %p26
    %p28 = scmp.ne.s32.totalorder %s17, %s20
    %p29 = scmp.eq.s32.totalorder %s12, 7
    %p30 = por %p28, %p29
    %p31 = scmp.ne.s32.totalorder %s20, %s21
    %p32 = scmp.eq.s32.totalorder %s12, 0
    %p33 = por %p31, %p32
    %p34 = scmp.ne.s32.totalorder %s20, %s21
    %p35 = scmp.eq.s32.totalorder %s13, 7
    %p36 = por %p34, %p35
    %p38 = scmp.ne.s32.totalorder %s21, %s37
    %p39 = scmp.eq.s32.totalorder %s13, 0
    %p40 = por %p38, %p39
    %s41 = ssub.s32 %s7, %s14
    %p42 = scmp.eq.s32.totalorder %s41, 0
    %s44 = sadd.s32 %s43, 1
    %s45 = scalar_select %p42, %s43, %s44
    %p48 = pneg %p42
    %p49 = scmp.eq.s32.totalorder %s7, 7
    %p50 = por %p48, %p49
    %p51 = scmp.ne.s32.totalorder %s43, %s46
    %p52 = scmp.eq.s32.totalorder %s7, 0
    %p53 = por %p51, %p52
    %p54 = scmp.ne.s32.totalorder %s43, %s46
    %p55 = scmp.eq.s32.totalorder %s12, 7
    %p56 = por %p54, %p55
    %p57 = scmp.ne.s32.totalorder %s46, %s47
    %p58 = scmp.eq.s32.totalorder %s12, 0
    %p59 = por %p57, %p58
    %p60 = scmp.ne.s32.totalorder %s46, %s47
    %p61 = scmp.eq.s32.totalorder %s13, 7
    %p62 = por %p60, %p61
    %p64 = scmp.ne.s32.totalorder %s47, %s63
    %p65 = scmp.eq.s32.totalorder %s13, 0
    %p66 = por %p64, %p65
    %p67 = scmp.le.s32.totalorder 1, %s7
    %p68 = scmp.lt.s32.totalorder %s7, 9
    %p69 = pnand %p67, %p68
    %p70 = pneg %p69
    // Predicated region
    $region9: #{video_model_stem_forward.3} parent=5 // pred_check
      _
    $region10: #{video_model_stem_forward.3} parent=5 // pred_check_branch
      %72 = sbr.rel (%p69) target = $region12
    $region11: #{video_model_stem_forward.3} parent=5 // pred_region
      %s73 = ssub.s32 %s7, 1
    $region12: #{video_model_stem_forward.3} parent=5 // pred_fallthru
      _
    %p74 = scmp.lt.s32.totalorder %s7, 8
    // Predicated region
    $region13: #{video_model_stem_forward.3} parent=5 // pred_check
      %p75 = pneg %p74
    $region14: #{video_model_stem_forward.3} parent=5 // pred_check_branch
      %77 = sbr.rel (%p75) target = $region16
    $region15: #{video_model_stem_forward.3} parent=5 // pred_region
      // Predicated region
      $region17: #{video_model_stem_forward.3} parent=15 // pred_check
        %p78 = pneg %p27
      $region18: #{video_model_stem_forward.3} parent=15 // pred_check_branch
        %80 = sbr.rel (%p78) target = $region20
      $region19: #{video_model_stem_forward.3} parent=15 // pred_region
        %p81 = scmp.lt.s32.totalorder %s7, 7
        %s82 = scalar_select %p81, %s7, 7
        %s83 = smul.addr %s82, 72
        %s84 = smul.addr %s83, 8
        %s85 = scalar_lea.vmem %s0, %s84
      $region20: #{video_model_stem_forward.3} parent=15 // pred_fallthru
        _
    $region16: #{video_model_stem_forward.3} parent=5 // pred_fallthru
      _
    %p86 = scmp.le.s32.totalorder 1, %s7
    %p87 = scmp.lt.s32.totalorder %s7, 9
    %p88 = pnand %p86, %p87
    %p89 = pneg %p88
    // Predicated region
    $region21: #{video_model_stem_forward.3} parent=5 // pred_check
      _
    $region22: #{video_model_stem_forward.3} parent=5 // pred_check_branch
      %91 = sbr.rel (%p88) target = $region24
    $region23: #{video_model_stem_forward.3} parent=5 // pred_region
      %s92 = ssub.s32 %s7, 1
      %p93 = scmp.lt.s32.totalorder %s12, 7
      %s94 = scalar_select %p93, %s12, 7
      %s95 = smul.addr %s94, 72
      %s96 = smul.addr %s95, 8
      %s97 = scalar_lea.vmem %s0, %s96
      %p98 = pneg %p33
      %p99 = pneg %p30
      %p100 = pneg %p59
      %p101 = pneg %p56
      %p102 = scmp.lt.s32.totalorder %s12, 7
      %s103 = scalar_select %p102, %s12, 7
      %s104 = smul.addr %s103, 8
      %s105 = smul.addr %s104, 8
      %s106 = scalar_lea.vmem %s1, %s105
      %p107 = scmp.lt.s32.totalorder %s12, 7
      %s108 = scalar_select %p107, %s12, 7
      %s109 = smul.addr %s108, 72
      %s110 = smul.addr %s109, 8
      %s111 = scalar_lea.vmem %s0, %s110
      %p112 = scmp.lt.s32.totalorder %s12, 7
      %s113 = scalar_select %p112, %s12, 7
      %s114 = smul.addr %s113, 8
      %s115 = smul.addr %s114, 8
      %s116 = scalar_lea.vmem %s1, %s115
      %v117 = vld [vmem:[%s111] sm:$0xff]
      %v118 = vld [vmem:[%s111 + $0x8] sm:$0xff]
      %v119 = vld [vmem:[%s111 + $0x10] sm:$0x1]
      %v120 = vld [vmem:[%s111 + $0x20] sm:$0xff]
      %v121 = vld [vmem:[%s111 + $0x28] sm:$0xff]
      %v122 = vld [vmem:[%s111 + $0x30] sm:$0x1]
      %v123 = vld [vmem:[%s111 + $0x40] sm:$0xff]
      %v124 = vld [vmem:[%s111 + $0x48] sm:$0xff]
      %v125 = vld [vmem:[%s111 + $0x50] sm:$0x1]
      %v126 = vld [vmem:[%s111 + $0x60] sm:$0xff]
      %v127 = vld [vmem:[%s111 + $0x68] sm:$0xff]
      %v128 = vld [vmem:[%s111 + $0x70] sm:$0x1]
      %v129 = vld [vmem:[%s111 + $0x80] sm:$0xff]
      %v130 = vld [vmem:[%s111 + $0x88] sm:$0xff]
      %v131 = vld [vmem:[%s111 + $0x90] sm:$0x1]
      %v132 = vld [vmem:[%s111 + $0xa0] sm:$0xff]
      %v133 = vld [vmem:[%s111 + $0xa8] sm:$0xff]
      %v134 = vld [vmem:[%s111 + $0xb0] sm:$0x1]
      %v135 = vld [vmem:[%s111 + $0xc0] sm:$0xff]
      %v136 = vld [vmem:[%s111 + $0xc8] sm:$0xff]
      %v137 = vld [vmem:[%s111 + $0xd0] sm:$0x1]
      %v138 = vld [vmem:[%s111 + $0xe0] sm:$0xff]
      %v139 = vld [vmem:[%s111 + $0xe8] sm:$0xff]
      %v140 = vld [vmem:[%s111 + $0xf0] sm:$0x1]
      %v141 = vld [vmem:[%s111 + $0x100] sm:$0xff]
      %v142 = vld [vmem:[%s111 + $0x108] sm:$0xff]
      %v143 = vld [vmem:[%s111 + $0x110] sm:$0x1]
      %v144 = vld [vmem:[%s111 + $0x120] sm:$0xff]
      %v145 = vld [vmem:[%s111 + $0x128] sm:$0xff]
      %v146 = vld [vmem:[%s111 + $0x130] sm:$0x1]
      %v147 = vld [vmem:[%s111 + $0x140] sm:$0xff]
      %v148 = vld [vmem:[%s111 + $0x148] sm:$0xff]
      %v149 = vld [vmem:[%s111 + $0x150] sm:$0x1]
      %v150 = vld [vmem:[%s111 + $0x160] sm:$0xff]
      %v151 = vld [vmem:[%s111 + $0x168] sm:$0xff]
      %v152 = vld [vmem:[%s111 + $0x170] sm:$0x1]
      %v153 = vld [vmem:[%s111 + $0x180] sm:$0xff]
      %v154 = vld [vmem:[%s111 + $0x188] sm:$0xff]
      %v155 = vld [vmem:[%s111 + $0x190] sm:$0x1]
      %v156 = vld [vmem:[%s111 + $0x1a0] sm:$0xff]
      %v157 = vld [vmem:[%s111 + $0x1a8] sm:$0xff]
      %v158 = vld [vmem:[%s111 + $0x1b0] sm:$0x1]
      %v159 = vld [vmem:[%s111 + $0x1c0] sm:$0xff]
      %v160 = vld [vmem:[%s111 + $0x1c8] sm:$0xff]
      %v161 = vld [vmem:[%s111 + $0x1d0] sm:$0x1]
      %v162 = vld [vmem:[%s111 + $0x1e0] sm:$0xff]
      %v163 = vld [vmem:[%s111 + $0x1e8] sm:$0xff]
      %v164 = vld [vmem:[%s111 + $0x1f0] sm:$0x1]
      %v165 = vld [vmem:[%s111 + $0x200] sm:$0xff]
      %v166 = vld [vmem:[%s111 + $0x208] sm:$0xff]
      %v167 = vld [vmem:[%s111 + $0x210] sm:$0x1]
      %v168 = vmax.f32 %v117, %v120
      %v169 = vmax.f32 %v118, %v121
      %v170 = vmax.f32 %v119, %v122
      %v171 = vmax.f32 %v123, %v126
      %v172 = vmax.f32 %v124, %v127
      %v173 = vmax.f32 %v125, %v128
      %v174 = vmax.f32 %v129, %v132
      %v175 = vmax.f32 %v130, %v133
      %v176 = vmax.f32 %v131, %v134
      %v177 = vmax.f32 %v135, %v138
      %v178 = vmax.f32 %v136, %v139
      %v179 = vmax.f32 %v137, %v140
      %v180 = vmax.f32 %v141, %v144
      %v181 = vmax.f32 %v142, %v145
      %v182 = vmax.f32 %v143, %v146
      %v183 = vmax.f32 %v147, %v150
      %v184 = vmax.f32 %v148, %v151
      %v185 = vmax.f32 %v149, %v152
      %v186 = vmax.f32 %v153, %v156
      %v187 = vmax.f32 %v154, %v157
      %v188 = vmax.f32 %v155, %v158
      %v189 = vmax.f32 %v159, %v162
      %v190 = vmax.f32 %v160, %v163
      %v191 = vmax.f32 %v161, %v164
      %v192 = vmax.f32 %v168, %v123
      %v193 = vmax.f32 %v169, %v124
      %v194 = vmax.f32 %v170, %v125
      %v195 = vmax.f32 %v171, %v129
      %v196 = vmax.f32 %v172, %v130
      %v197 = vmax.f32 %v173, %v131
      %v198 = vmax.f32 %v174, %v135
      %v199 = vmax.f32 %v175, %v136
      %v200 = vmax.f32 %v176, %v137
      %v201 = vmax.f32 %v177, %v141
      %v202 = vmax.f32 %v178, %v142
      %v203 = vmax.f32 %v179, %v143
      %v204 = vmax.f32 %v180, %v147
      %v205 = vmax.f32 %v181, %v148
      %v206 = vmax.f32 %v182, %v149
      %v207 = vmax.f32 %v183, %v153
      %v208 = vmax.f32 %v184, %v154
      %v209 = vmax.f32 %v185, %v155
      %v210 = vmax.f32 %v186, %v159
      %v211 = vmax.f32 %v187, %v160
      %v212 = vmax.f32 %v188, %v161
      %v213 = vmax.f32 %v189, %v165
      %v214 = vmax.f32 %v190, %v166
      %v215 = vmax.f32 %v191, %v167
      %v216 = vmax.f32 %v192, %v193
      %v217 = vmax.f32 %v195, %v196
      %v218 = vmax.f32 %v198, %v199
      %v219 = vmax.f32 %v201, %v202
      %v220 = vmax.f32 %v204, %v205
      %v221 = vmax.f32 %v207, %v208
      %v222 = vmax.f32 %v210, %v211
      %v223 = vmax.f32 %v213, %v214
      %vm240 = vcmask 1046528
      %v241 = vrot.slane %v192, 1
      %v242 = vrot.slane %v194, 1
      %v243 = vsel %vm240, %v241, %v242
      %v244 = vrot.slane %v195, 1
      %v245 = vrot.slane %v197, 1
      %v246 = vsel %vm240, %v244, %v245
      %v247 = vrot.slane %v198, 1
      %v248 = vrot.slane %v200, 1
      %v249 = vsel %vm240, %v247, %v248
      %v250 = vrot.slane %v201, 1
      %v251 = vrot.slane %v203, 1
      %v252 = vsel %vm240, %v250, %v251
      %v253 = vrot.slane %v204, 1
      %v254 = vrot.slane %v206, 1
      %v255 = vsel %vm240, %v253, %v254
      %v256 = vrot.slane %v207, 1
      %v257 = vrot.slane %v209, 1
      %v258 = vsel %vm240, %v256, %v257
      %v259 = vrot.slane %v210, 1
      %v260 = vrot.slane %v212, 1
      %v261 = vsel %vm240, %v259, %v260
      %v262 = vrot.slane %v213, 1
      %v263 = vrot.slane %v215, 1
      %v264 = vsel %vm240, %v262, %v263
      %v273 = vmax.f32 %v216, %v243
      %v274 = vmax.f32 %v217, %v246
      %v275 = vmax.f32 %v218, %v249
      %v276 = vmax.f32 %v219, %v252
      %v277 = vmax.f32 %v220, %v255
      %v278 = vmax.f32 %v221, %v258
      %v279 = vmax.f32 %v222, %v261
      %v280 = vmax.f32 %v223, %v264
      %281 = vst [vmem:[%s116] sm:$0xff] %v273
      %282 = vst [vmem:[%s116 + $0x8] sm:$0xff] %v274
      %283 = vst [vmem:[%s116 + $0x10] sm:$0xff] %v275
      %284 = vst [vmem:[%s116 + $0x18] sm:$0xff] %v276
      %285 = vst [vmem:[%s116 + $0x20] sm:$0xff] %v277
      %286 = vst [vmem:[%s116 + $0x28] sm:$0xff] %v278
      %287 = vst [vmem:[%s116 + $0x30] sm:$0xff] %v279
      %288 = vst [vmem:[%s116 + $0x38] sm:$0xff] %v280
      %p289 = scmp.lt.s32.totalorder %s12, 7
      %s290 = scalar_select %p289, %s12, 7
      %s291 = smul.addr %s290, 8
      %s292 = smul.addr %s291, 8
      %s293 = scalar_lea.vmem %s1, %s292
      // Predicated region
      $region25: #{video_model_stem_forward.3} parent=23 // pred_check
        %p294 = pneg %p56
      $region26: #{video_model_stem_forward.3} parent=23 // pred_check_branch
        %296 = sbr.rel (%p294) target = $region28
      $region27: #{video_model_stem_forward.3} parent=23 // pred_region
        _
      $region28: #{video_model_stem_forward.3} parent=23 // pred_fallthru
        _
    $region24: #{video_model_stem_forward.3} parent=5 // pred_fallthru
      _
    %p297 = scmp.le.s32.totalorder 2, %s7
    // Predicated region
    $region29: #{video_model_stem_forward.3} parent=5 // pred_check
      %p298 = pneg %p297
    $region30: #{video_model_stem_forward.3} parent=5 // pred_check_branch
      %300 = sbr.rel (%p298) target = $region32
    $region31: #{video_model_stem_forward.3} parent=5 // pred_region
      %s301 = ssub.s32 %s7, 2
      // Predicated region
      $region33: #{video_model_stem_forward.3} parent=31 // pred_check
        %p302 = pneg %p62
      $region34: #{video_model_stem_forward.3} parent=31 // pred_check_branch
        %304 = sbr.rel (%p302) target = $region36
      $region35: #{video_model_stem_forward.3} parent=31 // pred_region
        %p305 = scmp.lt.s32.totalorder %s13, 7
        %s306 = scalar_select %p305, %s13, 7
        %s307 = smul.addr %s306, 8
        %s308 = smul.addr %s307, 8
        %s309 = scalar_lea.vmem %s1, %s308
      $region36: #{video_model_stem_forward.3} parent=31 // pred_fallthru
        _
    $region32: #{video_model_stem_forward.3} parent=5 // pred_fallthru
      _
  $region6: #{video_model_stem_forward.3} parent=0 // loop_footer
    %s11 = sadd.s32 1, %s7
  $region7: #{video_model_stem_forward.3} parent=0 // loop_footer_branch
    %6 = sbr.rel target = $region3
  $region8: #{video_model_stem_forward.3} parent=0 // loop_exit
    _

</llo_original>
